<compile_context>
chip_gen: v7x
topology: tpu7x:2x2x1
jax: 0.10.0
libtpu: 0.0.40
codegen_flags: <defaults>
</compile_context>

<pallas_src>
import jax
import jax.numpy as jnp
from jax.experimental import pallas as pl
from jax.experimental.pallas import tpu as pltpu

B = 2        # batch
S = 8        # sequence length
E = 32       # embedding dim per number
H = 64       # RNN hidden size (input size = 2*E = 64)
V = 10       # vocab / output classes
N = S * B    # flattened time-major row count (row r = t*B + b)

VP = 24      # 2*V padded up to a multiple of 8 (sublane-aligned GEMM K dim)

# Row offsets inside the packed weight slab (all segment starts 8-aligned).
R_B0 = 0                   # b0           (1, H)
R_B1 = 1                   # b1           (1, H)
R_WX = 8                   # W_x padded   (VP, H)  (rows 2*V..VP-1 are zero)
R_WHH0 = R_WX + VP         # W_hh0        (H, H)
R_WIH1 = R_WHH0 + H        # W_ih1        (H, H)
R_WHH1 = R_WIH1 + H        # W_hh1        (H, H)
SLAB_ROWS = R_WHH1 + H     # 224


def _rnn_fused_kernel(idx_ref, wslab_ref, head_ref, out_ref):
    # ---- fused embedding gather + layer-0 input projection (one GEMM) -------
    # Build the concatenated one-hot (N, VP) directly with a single iota; the
    # padded columns (>= 2V) can never match an index in [0, V) so stay zero.
    iota = jax.lax.broadcasted_iota(jnp.int32, (N, VP), 1)
    first = iota < V
    idx1 = jnp.broadcast_to(idx_ref[:, 0:1], (N, VP))
    idx2 = jnp.broadcast_to(idx_ref[:, 1:2], (N, VP))
    target = jnp.where(first, idx1, idx2)
    pos = jnp.where(first, iota, iota - V)
    oh = (target == pos).astype(jnp.float32)                          # (N, VP)

    w_x = wslab_ref[pl.ds(R_WX, VP), :]                               # (VP, H)
    b0 = wslab_ref[pl.ds(R_B0, 1), :]                                 # (1, H)
    xw0 = jnp.dot(oh, w_x, preferred_element_type=jnp.float32) + b0   # (N, H)

    w_hh0 = wslab_ref[pl.ds(R_WHH0, H), :]                            # (H, H)
    w_ih1 = wslab_ref[pl.ds(R_WIH1, H), :]                            # (H, H)
    w_hh1 = wslab_ref[pl.ds(R_WHH1, H), :]                            # (H, H)
    b1b = jnp.broadcast_to(wslab_ref[pl.ds(R_B1, 1), :], (B, H))      # (B, H)

    # ---- recurrence: hidden state & history stay in registers ---------------
    h0 = jnp.zeros((B, H), jnp.float32)
    h1 = jnp.zeros((B, H), jnp.float32)
    hist = []
    for t in range(S):                                                # static unroll
        # h1_prev @ W_hh1 is independent of this step's layer-0 result, so it
        # is issued before the layer-0 tanh is consumed (two MXU pushes/step
        # in flight; per-step concat removed).
        p = jnp.dot(h1, w_hh1, preferred_element_type=jnp.float32) + b1b
        h0 = jnp.tanh(xw0[t * B:(t + 1) * B, :]
                      + jnp.dot(h0, w_hh0, preferred_element_type=jnp.float32))
        h1 = jnp.tanh(jnp.dot(h0, w_ih1, preferred_element_type=jnp.float32) + p)
        hist.append(h1)

    # ---- dense 64->10 head: ONE matmul, ONE time-major store ----------------
    h_all = jnp.concatenate(hist, axis=0)                             # (N, H)
    w_d = head_ref[pl.ds(0, H), :]                                    # (H, V)
    b_d = head_ref[pl.ds(H, 1), :]                                    # (1, V)
    out_ref[...] = jnp.dot(h_all, w_d, preferred_element_type=jnp.float32) + b_d


def _vmem_spec():
    return pl.BlockSpec(memory_space=pltpu.MemorySpace.VMEM)


def rnn_forward_pallas(idx, wslab, head):
    """idx: (N, 2) int32 time-major [num1|num2] indices -> time-major logits (N, V)."""
    cost = pl.CostEstimate(
        flops=2 * N * VP * H + S * 3 * 2 * B * H * H + 2 * N * H * V,
        transcendentals=2 * S * B * H,
        bytes_accessed=4 * (N * 2 + SLAB_ROWS * H + (H + 1) * V + N * V),
    )
    return pl.pallas_call(
        _rnn_fused_kernel,
        out_shape=jax.ShapeDtypeStruct((N, V), jnp.float32),
        in_specs=[_vmem_spec(), _vmem_spec(), _vmem_spec()],
        out_specs=_vmem_spec(),
        cost_estimate=cost,
    )(idx, wslab, head)


@jax.jit
def my_adv_rnn_forward(num1, num2, wslab, head):
    # Only tiny index packing + the final (S,B,V)->(B,S,V) transpose live
    # outside the kernel; everything else (embedding gather, 2-layer RNN,
    # dense head) is inside the single Pallas invocation.
    idx = jnp.stack([num1.T.reshape(N), num2.T.reshape(N)], axis=-1).astype(jnp.int32)
    logits_tm = rnn_forward_pallas(idx, wslab, head)      # (N, V), row r = t*B + b
    return logits_tm.reshape(S, B, V).transpose(1, 0, 2)  # (B, S, V)


def init_params(key):
    """Deterministic init mimicking PyTorch shapes (weights stored as (in, out))."""
    ks = jax.random.split(key, 10)
    bound = 1.0 / jnp.sqrt(H)

    def u(k, shape, b):
        return jax.random.uniform(k, shape, jnp.float32, -b, b)

    embed = u(ks[0], (V, E), 1.0)                    # nn.Embedding(10, 32)
    # layer 0 (input 64 -> hidden 64); b_ih + b_hh fused
    w_ih0 = u(ks[1], (H, H), bound)
    w_hh0 = u(ks[2], (H, H), bound)
    b0 = u(ks[3], (1, H), bound) + u(ks[4], (1, H), bound)
    # layer 1 (hidden 64 -> hidden 64)
    w_ih1 = u(ks[5], (H, H), bound)
    w_hh1 = u(ks[6], (H, H), bound)
    b1 = u(ks[7], (1, H), bound) + u(ks[8], (1, H), bound)
    # dense 64 -> 10
    kd1, kd2 = jax.random.split(ks[9])
    w_d = u(kd1, (H, V), bound)
    b_d = u(kd2, (1, V), bound)
    return embed, (w_ih0, w_hh0, b0, w_ih1, w_hh1, b1, w_d, b_d)


def pack_params(embed, params):
    """Fold embed into the layer-0 projection and pack all weights into 2 slabs."""
    (w_ih0, w_hh0, b0, w_ih1, w_hh1, b1, w_d, b_d) = params
    hi = jax.lax.Precision.HIGHEST
    # x @ W_ih0 == [onehot1, onehot2] @ [embed @ W_ih0[:E]; embed @ W_ih0[E:]]
    w_x = jnp.concatenate([jnp.dot(embed, w_ih0[:E, :], precision=hi),
                           jnp.dot(embed, w_ih0[E:, :], precision=hi)], axis=0)  # (2V, H)
    wslab = jnp.zeros((SLAB_ROWS, H), jnp.float32)
    wslab = wslab.at[R_B0].set(b0[0])
    wslab = wslab.at[R_B1].set(b1[0])
    wslab = wslab.at[R_WX:R_WX + 2 * V].set(w_x)
    wslab = wslab.at[R_WHH0:R_WHH0 + H].set(w_hh0)
    wslab = wslab.at[R_WIH1:R_WIH1 + H].set(w_ih1)
    wslab = wslab.at[R_WHH1:R_WHH1 + H].set(w_hh1)
    head = jnp.concatenate([w_d, b_d], axis=0)        # (H+1, V)
    return wslab, head


def _reference(num1, num2, embed, params):
    """Pure-JAX reference matching the PyTorch forward semantics."""
    (w_ih0, w_hh0, b0, w_ih1, w_hh1, b1, w_d, b_d) = params
    e1 = jnp.take(embed, num1, axis=0)
    e2 = jnp.take(embed, num2, axis=0)
    x = jnp.concatenate([e1, e2], axis=-1)
    h0 = jnp.zeros((B, H), jnp.float32)
    h1 = jnp.zeros((B, H), jnp.float32)
    outs = []
    for t in range(S):
        xt = x[:, t, :]
        h0 = jnp.tanh(xt @ w_ih0 + h0 @ w_hh0 + b0)
        h1 = jnp.tanh(h0 @ w_ih1 + h1 @ w_hh1 + b1)
        outs.append(h1 @ w_d + b_d)
    return jnp.stack(outs, axis=1)


if __name__ == "__main__":
    key = jax.random.PRNGKey(0)
    k_params, k_n1, k_n2 = jax.random.split(key, 3)
    embed, params = init_params(k_params)
    wslab, head = pack_params(embed, params)

    num1 = jax.random.randint(k_n1, (B, S), 0, V, dtype=jnp.int32)
    num2 = jax.random.randint(k_n2, (B, S), 0, V, dtype=jnp.int32)

    logits = my_adv_rnn_forward(num1, num2, wslab, head)
    logits = jax.block_until_ready(logits)

    ref = _reference(num1, num2, embed, params)
    assert logits.shape == (B, S, V)
    assert jnp.allclose(logits, ref, atol=1e-4, rtol=1e-4)

    print("KERNEL_OK")
</pallas_src>

<mosaic_0001>
module attributes {stable_mosaic.version = 11 : i64} {
  func.func @_rnn_fused_kernel(%arg0: memref<16x2xi32, #tpu.memory_space<vmem>>, %arg1: memref<224x64xf32, #tpu.memory_space<vmem>>, %arg2: memref<65x10xf32, #tpu.memory_space<vmem>>, %arg3: memref<16x10xf32, #tpu.memory_space<vmem>>) attributes {dimension_semantics = [], scalar_prefetch = 0 : i64, scratch_operands = 0 : i64, tpu.core_type = #tpu.core_type<tc>} {
    %0 = tpu.iota {dimensions = array<i32: 1>} : vector<16x24xi32>
    %c10_i32 = arith.constant 10 : i32
    %1 = vector.broadcast %c10_i32 : i32 to vector<16x24xi32>
    %2 = arith.cmpi slt, %0, %1 : vector<16x24xi32>
    %c0 = arith.constant 0 : index
    %c0_0 = arith.constant 0 : index
    %3 = vector.load %arg0[%c0, %c0_0] : memref<16x2xi32, #tpu.memory_space<vmem>>, vector<16x1xi32>
    %4 = vector.shape_cast %3 : vector<16x1xi32> to vector<16x1xi32>
    %5 = vector.broadcast %4 : vector<16x1xi32> to vector<16x24xi32>
    %c0_1 = arith.constant 0 : index
    %c1 = arith.constant 1 : index
    %6 = vector.load %arg0[%c0_1, %c1] : memref<16x2xi32, #tpu.memory_space<vmem>>, vector<16x1xi32>
    %7 = vector.shape_cast %6 : vector<16x1xi32> to vector<16x1xi32>
    %8 = vector.broadcast %7 : vector<16x1xi32> to vector<16x24xi32>
    %9 = arith.select %2, %5, %8 : vector<16x24xi1>, vector<16x24xi32>
    %c10_i32_2 = arith.constant 10 : i32
    %10 = vector.broadcast %c10_i32_2 : i32 to vector<16x24xi32>
    %11 = arith.subi %0, %10 : vector<16x24xi32>
    %12 = arith.select %2, %0, %11 : vector<16x24xi1>, vector<16x24xi32>
    %13 = arith.cmpi eq, %9, %12 : vector<16x24xi32>
    %14 = arith.extui %13 : vector<16x24xi1> to vector<16x24xi32>
    %15 = arith.sitofp %14 : vector<16x24xi32> to vector<16x24xf32>
    %c8 = arith.constant 8 : index
    %c0_3 = arith.constant 0 : index
    %16 = vector.load %arg1[%c8, %c0_3] : memref<224x64xf32, #tpu.memory_space<vmem>>, vector<24x64xf32>
    %c0_4 = arith.constant 0 : index
    %c0_5 = arith.constant 0 : index
    %17 = vector.load %arg1[%c0_4, %c0_5] : memref<224x64xf32, #tpu.memory_space<vmem>>, vector<1x64xf32>
    %cst = arith.constant dense<0.000000e+00> : vector<16x64xf32>
    %18 = tpu.matmul %15, %16, %cst {dimension_numbers = #tpu.dot_dimension_numbers<[1], [0], [0], [1], [0, 0, 1, 1], [], []>} : vector<16x24xf32>, vector<24x64xf32>, vector<16x64xf32> -> vector<16x64xf32>
    %19 = vector.broadcast %17 : vector<1x64xf32> to vector<16x64xf32>
    %20 = arith.addf %18, %19 : vector<16x64xf32>
    %c32 = arith.constant 32 : index
    %c0_6 = arith.constant 0 : index
    %21 = vector.load %arg1[%c32, %c0_6] : memref<224x64xf32, #tpu.memory_space<vmem>>, vector<64x64xf32>
    %c96 = arith.constant 96 : index
    %c0_7 = arith.constant 0 : index
    %22 = vector.load %arg1[%c96, %c0_7] : memref<224x64xf32, #tpu.memory_space<vmem>>, vector<64x64xf32>
    %c160 = arith.constant 160 : index
    %c0_8 = arith.constant 0 : index
    %23 = vector.load %arg1[%c160, %c0_8] : memref<224x64xf32, #tpu.memory_space<vmem>>, vector<64x64xf32>
    %c1_9 = arith.constant 1 : index
    %c0_10 = arith.constant 0 : index
    %24 = vector.load %arg1[%c1_9, %c0_10] : memref<224x64xf32, #tpu.memory_space<vmem>>, vector<1x64xf32>
    %25 = vector.shape_cast %24 : vector<1x64xf32> to vector<1x64xf32>
    %26 = vector.broadcast %25 : vector<1x64xf32> to vector<2x64xf32>
    %cst_11 = arith.constant 0.000000e+00 : f32
    %27 = vector.broadcast %cst_11 : f32 to vector<2x64xf32>
    %cst_12 = arith.constant 0.000000e+00 : f32
    %28 = vector.broadcast %cst_12 : f32 to vector<2x64xf32>
    %cst_13 = arith.constant dense<0.000000e+00> : vector<2x64xf32>
    %29 = tpu.matmul %28, %23, %cst_13 {dimension_numbers = #tpu.dot_dimension_numbers<[1], [0], [0], [1], [0, 0, 1, 1], [], []>} : vector<2x64xf32>, vector<64x64xf32>, vector<2x64xf32> -> vector<2x64xf32>
    %30 = arith.addf %29, %26 : vector<2x64xf32>
    %31 = vector.extract_strided_slice %20 {offsets = [0, 0], sizes = [2, 64], strides = [1, 1]} : vector<16x64xf32> to vector<2x64xf32>
    %cst_14 = arith.constant dense<0.000000e+00> : vector<2x64xf32>
    %32 = tpu.matmul %27, %21, %cst_14 {dimension_numbers = #tpu.dot_dimension_numbers<[1], [0], [0], [1], [0, 0, 1, 1], [], []>} : vector<2x64xf32>, vector<64x64xf32>, vector<2x64xf32> -> vector<2x64xf32>
    %33 = arith.addf %31, %32 : vector<2x64xf32>
    %34 = math.tanh %33 : vector<2x64xf32>
    %cst_15 = arith.constant dense<0.000000e+00> : vector<2x64xf32>
    %35 = tpu.matmul %34, %22, %cst_15 {dimension_numbers = #tpu.dot_dimension_numbers<[1], [0], [0], [1], [0, 0, 1, 1], [], []>} : vector<2x64xf32>, vector<64x64xf32>, vector<2x64xf32> -> vector<2x64xf32>
    %36 = arith.addf %35, %30 : vector<2x64xf32>
    %37 = math.tanh %36 : vector<2x64xf32>
    %cst_16 = arith.constant dense<0.000000e+00> : vector<2x64xf32>
    %38 = tpu.matmul %37, %23, %cst_16 {dimension_numbers = #tpu.dot_dimension_numbers<[1], [0], [0], [1], [0, 0, 1, 1], [], []>} : vector<2x64xf32>, vector<64x64xf32>, vector<2x64xf32> -> vector<2x64xf32>
    %39 = arith.addf %38, %26 : vector<2x64xf32>
    %40 = vector.extract_strided_slice %20 {offsets = [2, 0], sizes = [2, 64], strides = [1, 1]} : vector<16x64xf32> to vector<2x64xf32>
    %cst_17 = arith.constant dense<0.000000e+00> : vector<2x64xf32>
    %41 = tpu.matmul %34, %21, %cst_17 {dimension_numbers = #tpu.dot_dimension_numbers<[1], [0], [0], [1], [0, 0, 1, 1], [], []>} : vector<2x64xf32>, vector<64x64xf32>, vector<2x64xf32> -> vector<2x64xf32>
    %42 = arith.addf %40, %41 : vector<2x64xf32>
    %43 = math.tanh %42 : vector<2x64xf32>
    %cst_18 = arith.constant dense<0.000000e+00> : vector<2x64xf32>
    %44 = tpu.matmul %43, %22, %cst_18 {dimension_numbers = #tpu.dot_dimension_numbers<[1], [0], [0], [1], [0, 0, 1, 1], [], []>} : vector<2x64xf32>, vector<64x64xf32>, vector<2x64xf32> -> vector<2x64xf32>
    %45 = arith.addf %44, %39 : vector<2x64xf32>
    %46 = math.tanh %45 : vector<2x64xf32>
    %cst_19 = arith.constant dense<0.000000e+00> : vector<2x64xf32>
    %47 = tpu.matmul %46, %23, %cst_19 {dimension_numbers = #tpu.dot_dimension_numbers<[1], [0], [0], [1], [0, 0, 1, 1], [], []>} : vector<2x64xf32>, vector<64x64xf32>, vector<2x64xf32> -> vector<2x64xf32>
    %48 = arith.addf %47, %26 : vector<2x64xf32>
    %49 = vector.extract_strided_slice %20 {offsets = [4, 0], sizes = [2, 64], strides = [1, 1]} : vector<16x64xf32> to vector<2x64xf32>
    %cst_20 = arith.constant dense<0.000000e+00> : vector<2x64xf32>
    %50 = tpu.matmul %43, %21, %cst_20 {dimension_numbers = #tpu.dot_dimension_numbers<[1], [0], [0], [1], [0, 0, 1, 1], [], []>} : vector<2x64xf32>, vector<64x64xf32>, vector<2x64xf32> -> vector<2x64xf32>
    %51 = arith.addf %49, %50 : vector<2x64xf32>
    %52 = math.tanh %51 : vector<2x64xf32>
    %cst_21 = arith.constant dense<0.000000e+00> : vector<2x64xf32>
    %53 = tpu.matmul %52, %22, %cst_21 {dimension_numbers = #tpu.dot_dimension_numbers<[1], [0], [0], [1], [0, 0, 1, 1], [], []>} : vector<2x64xf32>, vector<64x64xf32>, vector<2x64xf32> -> vector<2x64xf32>
    %54 = arith.addf %53, %48 : vector<2x64xf32>
    %55 = math.tanh %54 : vector<2x64xf32>
    %cst_22 = arith.constant dense<0.000000e+00> : vector<2x64xf32>
    %56 = tpu.matmul %55, %23, %cst_22 {dimension_numbers = #tpu.dot_dimension_numbers<[1], [0], [0], [1], [0, 0, 1, 1], [], []>} : vector<2x64xf32>, vector<64x64xf32>, vector<2x64xf32> -> vector<2x64xf32>
    %57 = arith.addf %56, %26 : vector<2x64xf32>
    %58 = vector.extract_strided_slice %20 {offsets = [6, 0], sizes = [2, 64], strides = [1, 1]} : vector<16x64xf32> to vector<2x64xf32>
    %cst_23 = arith.constant dense<0.000000e+00> : vector<2x64xf32>
    %59 = tpu.matmul %52, %21, %cst_23 {dimension_numbers = #tpu.dot_dimension_numbers<[1], [0], [0], [1], [0, 0, 1, 1], [], []>} : vector<2x64xf32>, vector<64x64xf32>, vector<2x64xf32> -> vector<2x64xf32>
    %60 = arith.addf %58, %59 : vector<2x64xf32>
    %61 = math.tanh %60 : vector<2x64xf32>
    %cst_24 = arith.constant dense<0.000000e+00> : vector<2x64xf32>
    %62 = tpu.matmul %61, %22, %cst_24 {dimension_numbers = #tpu.dot_dimension_numbers<[1], [0], [0], [1], [0, 0, 1, 1], [], []>} : vector<2x64xf32>, vector<64x64xf32>, vector<2x64xf32> -> vector<2x64xf32>
    %63 = arith.addf %62, %57 : vector<2x64xf32>
    %64 = math.tanh %63 : vector<2x64xf32>
    %cst_25 = arith.constant dense<0.000000e+00> : vector<2x64xf32>
    %65 = tpu.matmul %64, %23, %cst_25 {dimension_numbers = #tpu.dot_dimension_numbers<[1], [0], [0], [1], [0, 0, 1, 1], [], []>} : vector<2x64xf32>, vector<64x64xf32>, vector<2x64xf32> -> vector<2x64xf32>
    %66 = arith.addf %65, %26 : vector<2x64xf32>
    %67 = vector.extract_strided_slice %20 {offsets = [8, 0], sizes = [2, 64], strides = [1, 1]} : vector<16x64xf32> to vector<2x64xf32>
    %cst_26 = arith.constant dense<0.000000e+00> : vector<2x64xf32>
    %68 = tpu.matmul %61, %21, %cst_26 {dimension_numbers = #tpu.dot_dimension_numbers<[1], [0], [0], [1], [0, 0, 1, 1], [], []>} : vector<2x64xf32>, vector<64x64xf32>, vector<2x64xf32> -> vector<2x64xf32>
    %69 = arith.addf %67, %68 : vector<2x64xf32>
    %70 = math.tanh %69 : vector<2x64xf32>
    %cst_27 = arith.constant dense<0.000000e+00> : vector<2x64xf32>
    %71 = tpu.matmul %70, %22, %cst_27 {dimension_numbers = #tpu.dot_dimension_numbers<[1], [0], [0], [1], [0, 0, 1, 1], [], []>} : vector<2x64xf32>, vector<64x64xf32>, vector<2x64xf32> -> vector<2x64xf32>
    %72 = arith.addf %71, %66 : vector<2x64xf32>
    %73 = math.tanh %72 : vector<2x64xf32>
    %cst_28 = arith.constant dense<0.000000e+00> : vector<2x64xf32>
    %74 = tpu.matmul %73, %23, %cst_28 {dimension_numbers = #tpu.dot_dimension_numbers<[1], [0], [0], [1], [0, 0, 1, 1], [], []>} : vector<2x64xf32>, vector<64x64xf32>, vector<2x64xf32> -> vector<2x64xf32>
    %75 = arith.addf %74, %26 : vector<2x64xf32>
    %76 = vector.extract_strided_slice %20 {offsets = [10, 0], sizes = [2, 64], strides = [1, 1]} : vector<16x64xf32> to vector<2x64xf32>
    %cst_29 = arith.constant dense<0.000000e+00> : vector<2x64xf32>
    %77 = tpu.matmul %70, %21, %cst_29 {dimension_numbers = #tpu.dot_dimension_numbers<[1], [0], [0], [1], [0, 0, 1, 1], [], []>} : vector<2x64xf32>, vector<64x64xf32>, vector<2x64xf32> -> vector<2x64xf32>
    %78 = arith.addf %76, %77 : vector<2x64xf32>
    %79 = math.tanh %78 : vector<2x64xf32>
    %cst_30 = arith.constant dense<0.000000e+00> : vector<2x64xf32>
    %80 = tpu.matmul %79, %22, %cst_30 {dimension_numbers = #tpu.dot_dimension_numbers<[1], [0], [0], [1], [0, 0, 1, 1], [], []>} : vector<2x64xf32>, vector<64x64xf32>, vector<2x64xf32> -> vector<2x64xf32>
    %81 = arith.addf %80, %75 : vector<2x64xf32>
    %82 = math.tanh %81 : vector<2x64xf32>
    %cst_31 = arith.constant dense<0.000000e+00> : vector<2x64xf32>
    %83 = tpu.matmul %82, %23, %cst_31 {dimension_numbers = #tpu.dot_dimension_numbers<[1], [0], [0], [1], [0, 0, 1, 1], [], []>} : vector<2x64xf32>, vector<64x64xf32>, vector<2x64xf32> -> vector<2x64xf32>
    %84 = arith.addf %83, %26 : vector<2x64xf32>
    %85 = vector.extract_strided_slice %20 {offsets = [12, 0], sizes = [2, 64], strides = [1, 1]} : vector<16x64xf32> to vector<2x64xf32>
    %cst_32 = arith.constant dense<0.000000e+00> : vector<2x64xf32>
    %86 = tpu.matmul %79, %21, %cst_32 {dimension_numbers = #tpu.dot_dimension_numbers<[1], [0], [0], [1], [0, 0, 1, 1], [], []>} : vector<2x64xf32>, vector<64x64xf32>, vector<2x64xf32> -> vector<2x64xf32>
    %87 = arith.addf %85, %86 : vector<2x64xf32>
    %88 = math.tanh %87 : vector<2x64xf32>
    %cst_33 = arith.constant dense<0.000000e+00> : vector<2x64xf32>
    %89 = tpu.matmul %88, %22, %cst_33 {dimension_numbers = #tpu.dot_dimension_numbers<[1], [0], [0], [1], [0, 0, 1, 1], [], []>} : vector<2x64xf32>, vector<64x64xf32>, vector<2x64xf32> -> vector<2x64xf32>
    %90 = arith.addf %89, %84 : vector<2x64xf32>
    %91 = math.tanh %90 : vector<2x64xf32>
    %cst_34 = arith.constant dense<0.000000e+00> : vector<2x64xf32>
    %92 = tpu.matmul %91, %23, %cst_34 {dimension_numbers = #tpu.dot_dimension_numbers<[1], [0], [0], [1], [0, 0, 1, 1], [], []>} : vector<2x64xf32>, vector<64x64xf32>, vector<2x64xf32> -> vector<2x64xf32>
    %93 = arith.addf %92, %26 : vector<2x64xf32>
    %94 = vector.extract_strided_slice %20 {offsets = [14, 0], sizes = [2, 64], strides = [1, 1]} : vector<16x64xf32> to vector<2x64xf32>
    %cst_35 = arith.constant dense<0.000000e+00> : vector<2x64xf32>
    %95 = tpu.matmul %88, %21, %cst_35 {dimension_numbers = #tpu.dot_dimension_numbers<[1], [0], [0], [1], [0, 0, 1, 1], [], []>} : vector<2x64xf32>, vector<64x64xf32>, vector<2x64xf32> -> vector<2x64xf32>
    %96 = arith.addf %94, %95 : vector<2x64xf32>
    %97 = math.tanh %96 : vector<2x64xf32>
    %cst_36 = arith.constant dense<0.000000e+00> : vector<2x64xf32>
    %98 = tpu.matmul %97, %22, %cst_36 {dimension_numbers = #tpu.dot_dimension_numbers<[1], [0], [0], [1], [0, 0, 1, 1], [], []>} : vector<2x64xf32>, vector<64x64xf32>, vector<2x64xf32> -> vector<2x64xf32>
    %99 = arith.addf %98, %93 : vector<2x64xf32>
    %100 = math.tanh %99 : vector<2x64xf32>
    %101 = tpu.concatenate %37, %46, %55, %64, %73, %82, %91, %100 in 0 : vector<2x64xf32>, vector<2x64xf32>, vector<2x64xf32>, vector<2x64xf32>, vector<2x64xf32>, vector<2x64xf32>, vector<2x64xf32>, vector<2x64xf32> -> vector<16x64xf32>
    %c0_37 = arith.constant 0 : index
    %c0_38 = arith.constant 0 : index
    %102 = vector.load %arg2[%c0_37, %c0_38] : memref<65x10xf32, #tpu.memory_space<vmem>>, vector<64x10xf32>
    %c64 = arith.constant 64 : index
    %c0_39 = arith.constant 0 : index
    %103 = vector.load %arg2[%c64, %c0_39] : memref<65x10xf32, #tpu.memory_space<vmem>>, vector<1x10xf32>
    %cst_40 = arith.constant dense<0.000000e+00> : vector<16x10xf32>
    %104 = tpu.matmul %101, %102, %cst_40 {dimension_numbers = #tpu.dot_dimension_numbers<[1], [0], [0], [1], [0, 0, 1, 1], [], []>} : vector<16x64xf32>, vector<64x10xf32>, vector<16x10xf32> -> vector<16x10xf32>
    %105 = vector.broadcast %103 : vector<1x10xf32> to vector<16x10xf32>
    %106 = arith.addf %104, %105 : vector<16x10xf32>
    %c0_41 = arith.constant 0 : index
    %c0_42 = arith.constant 0 : index
    %107 = vector.load %arg3[%c0_41, %c0_42] : memref<16x10xf32, #tpu.memory_space<vmem>>, vector<16x10xf32>
    tpu.vector_store %arg3[%c0_41, %c0_42], %106 {strides = array<i32>} : memref<16x10xf32, #tpu.memory_space<vmem>>, vector<16x10xf32>,
    return
  }
}

</mosaic_0001>

<llo_original>
// kernel: my_adv_rnn_forward.1
$region0: #{my_adv_rnn_forward.1}
  #allocation0 [shape = 'u32[]', space=smem, size = 0x4, offset = 0x4, fixed_abs, tag = 'smem constant byte address 0x4 - core index']
  #allocation1 [shape = 'u32[144,128]{1,0:T(1,128)}', space=vmem, size = 0x12000, scoped, tag = 'internal scratch']
  %s0 = inlined_call_operand.vmem [shape: s32[16,2], index: 0, kind: input, shape index: {}]
  %s1 = inlined_call_operand.vmem [shape: f32[224,64], index: 1, kind: input, shape index: {}]
  %s2 = inlined_call_operand.vmem [shape: f32[65,10], index: 2, kind: input, shape index: {}]
  %s3 = inlined_call_operand.vmem [shape: f32[16,10], index: 3, kind: output, shape index: {}]
  %s4 = sld [smem:[#allocation0]]
  $region22: #{my_adv_rnn_forward.1} parent=0
    _
  %s6 = ssub.s32 1, %s4
  %s7 = scalar_select 0, %s6, %s4
  // Predicated region
  $region2: #{my_adv_rnn_forward.1} parent=0 // pred_check
    _
  $region3: #{my_adv_rnn_forward.1} parent=0 // pred_check_branch
    %9 = sbr.rel (0) target = $region5
  $region4: #{my_adv_rnn_forward.1} parent=0 // pred_region
    _
  $region5: #{my_adv_rnn_forward.1} parent=0 // pred_fallthru
    _
  // Predicated region
  $region6: #{my_adv_rnn_forward.1} parent=0 // pred_check
    _
  $region7: #{my_adv_rnn_forward.1} parent=0 // pred_check_branch
    %11 = sbr.rel (0) target = $region9
  $region8: #{my_adv_rnn_forward.1} parent=0 // pred_region
    _
  $region9: #{my_adv_rnn_forward.1} parent=0 // pred_fallthru
    _
  // Predicated region
  $region10: #{my_adv_rnn_forward.1} parent=0 // pred_check
    _
  $region11: #{my_adv_rnn_forward.1} parent=0 // pred_check_branch
    %13 = sbr.rel (0) target = $region13
  $region12: #{my_adv_rnn_forward.1} parent=0 // pred_region
    _
  $region13: #{my_adv_rnn_forward.1} parent=0 // pred_fallthru
    _
  %v14 = vlaneseq
  %v15 = vand.u32 %v14, 127
  %vm16 = vcmp.lt.s32.totalorder %v15, 10
  %v17 = vld [vmem:[%s0] sm:$0xff]
  %v18 = vld [vmem:[%s0 + $0x8] sm:$0xff]
  %19 = vset.pattern.permute.xlu0 0
  %20 = vperm.xlu0 %19, %v17
  %v21 = vpop.permute.xlu0 %20
  %22 = vset.pattern.permute.xlu0 0
  %23 = vperm.xlu0 %22, %v18
  %v24 = vpop.permute.xlu0 %23
  %25 = vset.pattern.permute.xlu0 1
  %26 = vperm.xlu0 %25, %v17
  %v27 = vpop.permute.xlu0 %26
  %28 = vset.pattern.permute.xlu0 1
  %29 = vperm.xlu0 %28, %v18
  %v30 = vpop.permute.xlu0 %29
  %v31 = vsel %vm16, %v21, %v27
  %v32 = vsel %vm16, %v24, %v30
  %v33 = vsub.s32 %v15, 10
  %v34 = vsel %vm16, %v15, %v33
  %vm35 = vcmp.eq.s32.totalorder %v31, %v34
  %vm36 = vcmp.eq.s32.totalorder %v32, %v34
  %v37 = vsel %vm35, 1, 0
  %v38 = vsel %vm36, 1, 0
  %v39 = vcvt.s32.f32 %v37
  %v40 = vcvt.s32.f32 %v38
  %v41 = vld [vmem:[%s1 + $0x8] sm:$0xff]
  %v42 = vld [vmem:[%s1 + $0x10] sm:$0xff]
  %v43 = vld [vmem:[%s1 + $0x18] sm:$0xff]
  %v44 = vld [vmem:[%s1] sm:$0x1]
  %v45 = vlaneseq
  %v46 = vshrl.u32 %v45, 7
  %v47 = vsub.s32 0, %v46
  %v48 = vrot.slane %v44, %v47
  %vm49 = vcmask 195584
  %v51 = vsel %vm49, %v39, 0
  %v54 = vsel %vm49, %v40, 0
  %56 = vmatprep.subr.mxu0 0.0
  %57 = vmatpush1.msra.mxu0 %v41
  %58 = vmatprep.subr.mxu0 0.0
  %59 = vmatpush1.msra.mxu0 %v42
  %60 = vmatprep.subr.mxu0 0.0
  %61 = vmatpush1.msra.mxu0 %v43
  %62 = vmatprep.subr.mxu0 0.0
  %63 = vmatpush1.msra.mxu0 0.0
  %64 = vmatprep.subr.mxu0 0.0
  %65 = vmatpush1.msra.mxu0 0.0
  %66 = vmatprep.subr.mxu0 0.0
  %67 = vmatpush1.msra.mxu0 0.0
  %68 = vmatprep.subr.mxu0 0.0
  %69 = vmatpush1.msra.mxu0 0.0
  %70 = vmatprep.subr.mxu0 0.0
  %71 = vmatpush1.msra.mxu0 0.0
  %72 = vmatprep.subr.mxu0 0.0
  %73 = vmatpush1.msra.mxu0 0.0
  %74 = vmatprep.subr.mxu0 0.0
  %75 = vmatpush1.msra.mxu0 0.0
  %76 = vmatprep.subr.mxu0 0.0
  %77 = vmatpush1.msra.mxu0 0.0
  %78 = vmatprep.subr.mxu0 0.0
  %79 = vmatpush1.msra.mxu0 0.0
  %80 = vmatprep.subr.mxu0 0.0
  %81 = vmatpush1.msra.mxu0 0.0
  %82 = vmatprep.subr.mxu0 0.0
  %83 = vmatpush1.msra.mxu0 0.0
  %84 = vmatprep.subr.mxu0 0.0
  %85 = vmatpush1.msra.mxu0 0.0
  %86 = vmatprep.subr.mxu0 0.0
  %87 = vmatpush1.msra.mxu0 0.0
  %88 = vmatprep.subr.mxu0 0.0
  %89 = vmatpush1.msra.mxu0 0.0
  %90 = vmatprep.subr.mxu0 0.0
  %91 = vmatpush1.msra.mxu0 0.0
  %92 = vmatprep.subr.mxu0 0.0
  %93 = vmatpush1.msra.mxu0 0.0
  %94 = vmatprep.subr.mxu0 0.0
  %95 = vmatpush1.msra.mxu0 0.0
  %96 = vmatprep.subr.mxu0 0.0
  %97 = vmatpush1.msra.mxu0 0.0
  %98 = vmatprep.subr.mxu0 0.0
  %99 = vmatpush1.msra.mxu0 0.0
  %100 = vmatprep.subr.mxu0 0.0
  %101 = vmatpush1.msra.mxu0 0.0
  %102 = vmatprep.subr.mxu0 0.0
  %103 = vmatpush1.msra.mxu0 0.0
  %104 = vmatprep.subr.mxu0 0.0
  %105 = vmatpush1.msra.mxu0 0.0
  %106 = vmatprep.subr.mxu0 0.0
  %107 = vmatpush1.msra.mxu0 0.0
  %108 = vmatprep.subr.mxu0 0.0
  %109 = vmatpush1.msra.mxu0 0.0
  %110 = vmatprep.subr.mxu0 0.0
  %111 = vmatpush1.msra.mxu0 0.0
  %112 = vmatprep.subr.mxu0 0.0
  %113 = vmatpush1.msra.mxu0 0.0
  %114 = vmatprep.subr.mxu0 0.0
  %115 = vmatpush1.msra.mxu0 0.0
  %116 = vmatprep.subr.mxu0 0.0
  %117 = vmatpush1.msra.mxu0 0.0
  %118 = vmatprep.subr.mxu0 0.0
  %119 = vmatpush1.msra.mxu0 0.0
  %120 = vmatprep.mubr.f32.mxu0 0.0
  %121 = vmatmul.mubr.f32.gmra.mrb[0].mxu0 %v51
  %v122 = vpop.f32.mrb[0].mxu0
  %v123 = vadd.f32 %v48, %v122
  %v124 = vpop.f32.mrb[0].mxu0
  %125 = vmatprep.mubr.f32.mxu0 0.0
  %126 = vmatmul.mubr.f32.gmra.mrb[0].mxu0 %v54
  %v127 = vpop.f32.mrb[0].mxu0
  %v128 = vadd.f32 %v48, %v127
  %v129 = vpop.f32.mrb[0].mxu0
  %130 = vdwg.mxu0
  %v131 = vld [vmem:[%s1 + $0x20] sm:$0xff]
  %v132 = vld [vmem:[%s1 + $0x28] sm:$0xff]
  %v133 = vld [vmem:[%s1 + $0x30] sm:$0xff]
  %v134 = vld [vmem:[%s1 + $0x38] sm:$0xff]
  %v135 = vld [vmem:[%s1 + $0x40] sm:$0xff]
  %v136 = vld [vmem:[%s1 + $0x48] sm:$0xff]
  %v137 = vld [vmem:[%s1 + $0x50] sm:$0xff]
  %v138 = vld [vmem:[%s1 + $0x58] sm:$0xff]
  %v139 = vld [vmem:[%s1 + $0x60] sm:$0xff]
  %v140 = vld [vmem:[%s1 + $0x68] sm:$0xff]
  %v141 = vld [vmem:[%s1 + $0x70] sm:$0xff]
  %v142 = vld [vmem:[%s1 + $0x78] sm:$0xff]
  %v143 = vld [vmem:[%s1 + $0x80] sm:$0xff]
  %v144 = vld [vmem:[%s1 + $0x88] sm:$0xff]
  %v145 = vld [vmem:[%s1 + $0x90] sm:$0xff]
  %v146 = vld [vmem:[%s1 + $0x98] sm:$0xff]
  %v147 = vld [vmem:[%s1 + $0xa0] sm:$0xff]
  %v148 = vld [vmem:[%s1 + $0xa8] sm:$0xff]
  %v149 = vld [vmem:[%s1 + $0xb0] sm:$0xff]
  %v150 = vld [vmem:[%s1 + $0xb8] sm:$0xff]
  %v151 = vld [vmem:[%s1 + $0xc0] sm:$0xff]
  %v152 = vld [vmem:[%s1 + $0xc8] sm:$0xff]
  %v153 = vld [vmem:[%s1 + $0xd0] sm:$0xff]
  %v154 = vld [vmem:[%s1 + $0xd8] sm:$0xff]
  %v155 = vld [vmem:[%s1 + $0x1] sm:$0x1]
  %v156 = vlaneseq
  %v157 = vshrl.u32 %v156, 7
  %v158 = vsub.s32 0, %v157
  %v159 = vrot.slane %v155, %v158
  %vm160 = vcmask 523264
  %v162 = vsel %vm160, 0.0, 0
  %164 = vmatprep.subr.mxu0 0.0
  %165 = vmatpush1.msra.mxu0 %v147
  %166 = vmatprep.subr.mxu0 0.0
  %167 = vmatpush1.msra.mxu0 %v148
  %168 = vmatprep.subr.mxu0 0.0
  %169 = vmatpush1.msra.mxu0 %v149
  %170 = vmatprep.subr.mxu0 0.0
  %171 = vmatpush1.msra.mxu0 %v150
  %172 = vmatprep.subr.mxu0 0.0
  %173 = vmatpush1.msra.mxu0 %v151
  %174 = vmatprep.subr.mxu0 0.0
  %175 = vmatpush1.msra.mxu0 %v152
  %176 = vmatprep.subr.mxu0 0.0
  %177 = vmatpush1.msra.mxu0 %v153
  %178 = vmatprep.subr.mxu0 0.0
  %179 = vmatpush1.msra.mxu0 %v154
  %180 = vmatprep.subr.mxu0 0.0
  %181 = vmatpush1.msra.mxu0 0.0
  %182 = vmatprep.subr.mxu0 0.0
  %183 = vmatpush1.msra.mxu0 0.0
  %184 = vmatprep.subr.mxu0 0.0
  %185 = vmatpush1.msra.mxu0 0.0
  %186 = vmatprep.subr.mxu0 0.0
  %187 = vmatpush1.msra.mxu0 0.0
  %188 = vmatprep.subr.mxu0 0.0
  %189 = vmatpush1.msra.mxu0 0.0
  %190 = vmatprep.subr.mxu0 0.0
  %191 = vmatpush1.msra.mxu0 0.0
  %192 = vmatprep.subr.mxu0 0.0
  %193 = vmatpush1.msra.mxu0 0.0
  %194 = vmatprep.subr.mxu0 0.0
  %195 = vmatpush1.msra.mxu0 0.0
  %196 = vmatprep.subr.mxu0 0.0
  %197 = vmatpush1.msra.mxu0 0.0
  %198 = vmatprep.subr.mxu0 0.0
  %199 = vmatpush1.msra.mxu0 0.0
  %200 = vmatprep.subr.mxu0 0.0
  %201 = vmatpush1.msra.mxu0 0.0
  %202 = vmatprep.subr.mxu0 0.0
  %203 = vmatpush1.msra.mxu0 0.0
  %204 = vmatprep.subr.mxu0 0.0
  %205 = vmatpush1.msra.mxu0 0.0
  %206 = vmatprep.subr.mxu0 0.0
  %207 = vmatpush1.msra.mxu0 0.0
  %208 = vmatprep.subr.mxu0 0.0
  %209 = vmatpush1.msra.mxu0 0.0
  %210 = vmatprep.subr.mxu0 0.0
  %211 = vmatpush1.msra.mxu0 0.0
  %212 = vmatprep.subr.mxu0 0.0
  %213 = vmatpush1.msra.mxu0 0.0
  %214 = vmatprep.subr.mxu0 0.0
  %215 = vmatpush1.msra.mxu0 0.0
  %216 = vmatprep.subr.mxu0 0.0
  %217 = vmatpush1.msra.mxu0 0.0
  %218 = vmatprep.subr.mxu0 0.0
  %219 = vmatpush1.msra.mxu0 0.0
  %220 = vmatprep.subr.mxu0 0.0
  %221 = vmatpush1.msra.mxu0 0.0
  %222 = vmatprep.subr.mxu0 0.0
  %223 = vmatpush1.msra.mxu0 0.0
  %224 = vmatprep.subr.mxu0 0.0
  %225 = vmatpush1.msra.mxu0 0.0
  %226 = vmatprep.subr.mxu0 0.0
  %227 = vmatpush1.msra.mxu0 0.0
  %228 = vmatprep.mubr.f32.mxu0 0.0
  %229 = vmatmul.mubr.f32.gmra.mrb[0].mxu0 %v162
  %v230 = vpop.f32.mrb[0].mxu0
  %v231 = vadd.f32 %v159, %v230
  %v232 = vpop.f32.mrb[0].mxu0
  %233 = vdwg.mxu0
  %234 = vmatprep.subr.mxu0 0.0
  %235 = vmatpush1.msra.mxu0 %v131
  %236 = vmatprep.subr.mxu0 0.0
  %237 = vmatpush1.msra.mxu0 %v132
  %238 = vmatprep.subr.mxu0 0.0
  %239 = vmatpush1.msra.mxu0 %v133
  %240 = vmatprep.subr.mxu0 0.0
  %241 = vmatpush1.msra.mxu0 %v134
  %242 = vmatprep.subr.mxu0 0.0
  %243 = vmatpush1.msra.mxu0 %v135
  %244 = vmatprep.subr.mxu0 0.0
  %245 = vmatpush1.msra.mxu0 %v136
  %246 = vmatprep.subr.mxu0 0.0
  %247 = vmatpush1.msra.mxu0 %v137
  %248 = vmatprep.subr.mxu0 0.0
  %249 = vmatpush1.msra.mxu0 %v138
  %250 = vmatprep.subr.mxu0 0.0
  %251 = vmatpush1.msra.mxu0 0.0
  %252 = vmatprep.subr.mxu0 0.0
  %253 = vmatpush1.msra.mxu0 0.0
  %254 = vmatprep.subr.mxu0 0.0
  %255 = vmatpush1.msra.mxu0 0.0
  %256 = vmatprep.subr.mxu0 0.0
  %257 = vmatpush1.msra.mxu0 0.0
  %258 = vmatprep.subr.mxu0 0.0
  %259 = vmatpush1.msra.mxu0 0.0
  %260 = vmatprep.subr.mxu0 0.0
  %261 = vmatpush1.msra.mxu0 0.0
  %262 = vmatprep.subr.mxu0 0.0
  %263 = vmatpush1.msra.mxu0 0.0
  %264 = vmatprep.subr.mxu0 0.0
  %265 = vmatpush1.msra.mxu0 0.0
  %266 = vmatprep.subr.mxu0 0.0
  %267 = vmatpush1.msra.mxu0 0.0
  %268 = vmatprep.subr.mxu0 0.0
  %269 = vmatpush1.msra.mxu0 0.0
  %270 = vmatprep.subr.mxu0 0.0
  %271 = vmatpush1.msra.mxu0 0.0
  %272 = vmatprep.subr.mxu0 0.0
  %273 = vmatpush1.msra.mxu0 0.0
  %274 = vmatprep.subr.mxu0 0.0
  %275 = vmatpush1.msra.mxu0 0.0
  %276 = vmatprep.subr.mxu0 0.0
  %277 = vmatpush1.msra.mxu0 0.0
  %278 = vmatprep.subr.mxu0 0.0
  %279 = vmatpush1.msra.mxu0 0.0
  %280 = vmatprep.subr.mxu0 0.0
  %281 = vmatpush1.msra.mxu0 0.0
  %282 = vmatprep.subr.mxu0 0.0
  %283 = vmatpush1.msra.mxu0 0.0
  %284 = vmatprep.subr.mxu0 0.0
  %285 = vmatpush1.msra.mxu0 0.0
  %286 = vmatprep.subr.mxu0 0.0
  %287 = vmatpush1.msra.mxu0 0.0
  %288 = vmatprep.subr.mxu0 0.0
  %289 = vmatpush1.msra.mxu0 0.0
  %290 = vmatprep.subr.mxu0 0.0
  %291 = vmatpush1.msra.mxu0 0.0
  %292 = vmatprep.subr.mxu0 0.0
  %293 = vmatpush1.msra.mxu0 0.0
  %294 = vmatprep.subr.mxu0 0.0
  %295 = vmatpush1.msra.mxu0 0.0
  %296 = vmatprep.subr.mxu0 0.0
  %297 = vmatpush1.msra.mxu0 0.0
  %298 = vmatprep.mubr.f32.mxu0 0.0
  %299 = vmatmul.mubr.f32.gmra.mrb[0].mxu0 %v162
  %v300 = vpop.f32.mrb[0].mxu0
  %v301 = vadd.f32 0.0, %v300
  %v302 = vpop.f32.mrb[0].mxu0
  %303 = vdwg.mxu0
  %v304 = vadd.f32 %v123, %v301
  %v305 = vtanh.pop %v304
  %v307 = vsel %vm160, %v305, 0
  %309 = vmatprep.subr.mxu0 0.0
  %310 = vmatpush1.msra.mxu0 %v139
  %311 = vmatprep.subr.mxu0 0.0
  %312 = vmatpush1.msra.mxu0 %v140
  %313 = vmatprep.subr.mxu0 0.0
  %314 = vmatpush1.msra.mxu0 %v141
  %315 = vmatprep.subr.mxu0 0.0
  %316 = vmatpush1.msra.mxu0 %v142
  %317 = vmatprep.subr.mxu0 0.0
  %318 = vmatpush1.msra.mxu0 %v143
  %319 = vmatprep.subr.mxu0 0.0
  %320 = vmatpush1.msra.mxu0 %v144
  %321 = vmatprep.subr.mxu0 0.0
  %322 = vmatpush1.msra.mxu0 %v145
  %323 = vmatprep.subr.mxu0 0.0
  %324 = vmatpush1.msra.mxu0 %v146
  %325 = vmatprep.subr.mxu0 0.0
  %326 = vmatpush1.msra.mxu0 0.0
  %327 = vmatprep.subr.mxu0 0.0
  %328 = vmatpush1.msra.mxu0 0.0
  %329 = vmatprep.subr.mxu0 0.0
  %330 = vmatpush1.msra.mxu0 0.0
  %331 = vmatprep.subr.mxu0 0.0
  %332 = vmatpush1.msra.mxu0 0.0
  %333 = vmatprep.subr.mxu0 0.0
  %334 = vmatpush1.msra.mxu0 0.0
  %335 = vmatprep.subr.mxu0 0.0
  %336 = vmatpush1.msra.mxu0 0.0
  %337 = vmatprep.subr.mxu0 0.0
  %338 = vmatpush1.msra.mxu0 0.0
  %339 = vmatprep.subr.mxu0 0.0
  %340 = vmatpush1.msra.mxu0 0.0
  %341 = vmatprep.subr.mxu0 0.0
  %342 = vmatpush1.msra.mxu0 0.0
  %343 = vmatprep.subr.mxu0 0.0
  %344 = vmatpush1.msra.mxu0 0.0
  %345 = vmatprep.subr.mxu0 0.0
  %346 = vmatpush1.msra.mxu0 0.0
  %347 = vmatprep.subr.mxu0 0.0
  %348 = vmatpush1.msra.mxu0 0.0
  %349 = vmatprep.subr.mxu0 0.0
  %350 = vmatpush1.msra.mxu0 0.0
  %351 = vmatprep.subr.mxu0 0.0
  %352 = vmatpush1.msra.mxu0 0.0
  %353 = vmatprep.subr.mxu0 0.0
  %354 = vmatpush1.msra.mxu0 0.0
  %355 = vmatprep.subr.mxu0 0.0
  %356 = vmatpush1.msra.mxu0 0.0
  %357 = vmatprep.subr.mxu0 0.0
  %358 = vmatpush1.msra.mxu0 0.0
  %359 = vmatprep.subr.mxu0 0.0
  %360 = vmatpush1.msra.mxu0 0.0
  %361 = vmatprep.subr.mxu0 0.0
  %362 = vmatpush1.msra.mxu0 0.0
  %363 = vmatprep.subr.mxu0 0.0
  %364 = vmatpush1.msra.mxu0 0.0
  %365 = vmatprep.subr.mxu0 0.0
  %366 = vmatpush1.msra.mxu0 0.0
  %367 = vmatprep.subr.mxu0 0.0
  %368 = vmatpush1.msra.mxu0 0.0
  %369 = vmatprep.subr.mxu0 0.0
  %370 = vmatpush1.msra.mxu0 0.0
  %371 = vmatprep.subr.mxu0 0.0
  %372 = vmatpush1.msra.mxu0 0.0
  %373 = vmatprep.mubr.f32.mxu0 0.0
  %374 = vmatmul.mubr.f32.gmra.mrb[0].mxu0 %v307
  %v375 = vpop.f32.mrb[0].mxu0
  %v376 = vadd.f32 %v231, %v375
  %v377 = vpop.f32.mrb[0].mxu0
  %378 = vdwg.mxu0
  %v379 = vtanh.pop %v376
  %v381 = vsel %vm160, %v379, 0
  %383 = vmatprep.subr.mxu0 0.0
  %384 = vmatpush1.msra.mxu0 %v147
  %385 = vmatprep.subr.mxu0 0.0
  %386 = vmatpush1.msra.mxu0 %v148
  %387 = vmatprep.subr.mxu0 0.0
  %388 = vmatpush1.msra.mxu0 %v149
  %389 = vmatprep.subr.mxu0 0.0
  %390 = vmatpush1.msra.mxu0 %v150
  %391 = vmatprep.subr.mxu0 0.0
  %392 = vmatpush1.msra.mxu0 %v151
  %393 = vmatprep.subr.mxu0 0.0
  %394 = vmatpush1.msra.mxu0 %v152
  %395 = vmatprep.subr.mxu0 0.0
  %396 = vmatpush1.msra.mxu0 %v153
  %397 = vmatprep.subr.mxu0 0.0
  %398 = vmatpush1.msra.mxu0 %v154
  %399 = vmatprep.subr.mxu0 0.0
  %400 = vmatpush1.msra.mxu0 0.0
  %401 = vmatprep.subr.mxu0 0.0
  %402 = vmatpush1.msra.mxu0 0.0
  %403 = vmatprep.subr.mxu0 0.0
  %404 = vmatpush1.msra.mxu0 0.0
  %405 = vmatprep.subr.mxu0 0.0
  %406 = vmatpush1.msra.mxu0 0.0
  %407 = vmatprep.subr.mxu0 0.0
  %408 = vmatpush1.msra.mxu0 0.0
  %409 = vmatprep.subr.mxu0 0.0
  %410 = vmatpush1.msra.mxu0 0.0
  %411 = vmatprep.subr.mxu0 0.0
  %412 = vmatpush1.msra.mxu0 0.0
  %413 = vmatprep.subr.mxu0 0.0
  %414 = vmatpush1.msra.mxu0 0.0
  %415 = vmatprep.subr.mxu0 0.0
  %416 = vmatpush1.msra.mxu0 0.0
  %417 = vmatprep.subr.mxu0 0.0
  %418 = vmatpush1.msra.mxu0 0.0
  %419 = vmatprep.subr.mxu0 0.0
  %420 = vmatpush1.msra.mxu0 0.0
  %421 = vmatprep.subr.mxu0 0.0
  %422 = vmatpush1.msra.mxu0 0.0
  %423 = vmatprep.subr.mxu0 0.0
  %424 = vmatpush1.msra.mxu0 0.0
  %425 = vmatprep.subr.mxu0 0.0
  %426 = vmatpush1.msra.mxu0 0.0
  %427 = vmatprep.subr.mxu0 0.0
  %428 = vmatpush1.msra.mxu0 0.0
  %429 = vmatprep.subr.mxu0 0.0
  %430 = vmatpush1.msra.mxu0 0.0
  %431 = vmatprep.subr.mxu0 0.0
  %432 = vmatpush1.msra.mxu0 0.0
  %433 = vmatprep.subr.mxu0 0.0
  %434 = vmatpush1.msra.mxu0 0.0
  %435 = vmatprep.subr.mxu0 0.0
  %436 = vmatpush1.msra.mxu0 0.0
  %437 = vmatprep.subr.mxu0 0.0
  %438 = vmatpush1.msra.mxu0 0.0
  %439 = vmatprep.subr.mxu0 0.0
  %440 = vmatpush1.msra.mxu0 0.0
  %441 = vmatprep.subr.mxu0 0.0
  %442 = vmatpush1.msra.mxu0 0.0
  %443 = vmatprep.subr.mxu0 0.0
  %444 = vmatpush1.msra.mxu0 0.0
  %445 = vmatprep.subr.mxu0 0.0
  %446 = vmatpush1.msra.mxu0 0.0
  %447 = vmatprep.mubr.f32.mxu0 0.0
  %448 = vmatmul.mubr.f32.gmra.mrb[0].mxu0 %v381
  %v449 = vpop.f32.mrb[0].mxu0
  %v450 = vadd.f32 %v159, %v449
  %v451 = vpop.f32.mrb[0].mxu0
  %452 = vdwg.mxu0
  %453 = vmatprep.subr.mxu0 0.0
  %454 = vmatpush1.msra.mxu0 %v131
  %455 = vmatprep.subr.mxu0 0.0
  %456 = vmatpush1.msra.mxu0 %v132
  %457 = vmatprep.subr.mxu0 0.0
  %458 = vmatpush1.msra.mxu0 %v133
  %459 = vmatprep.subr.mxu0 0.0
  %460 = vmatpush1.msra.mxu0 %v134
  %461 = vmatprep.subr.mxu0 0.0
  %462 = vmatpush1.msra.mxu0 %v135
  %463 = vmatprep.subr.mxu0 0.0
  %464 = vmatpush1.msra.mxu0 %v136
  %465 = vmatprep.subr.mxu0 0.0
  %466 = vmatpush1.msra.mxu0 %v137
  %467 = vmatprep.subr.mxu0 0.0
  %468 = vmatpush1.msra.mxu0 %v138
  %469 = vmatprep.subr.mxu0 0.0
  %470 = vmatpush1.msra.mxu0 0.0
  %471 = vmatprep.subr.mxu0 0.0
  %472 = vmatpush1.msra.mxu0 0.0
  %473 = vmatprep.subr.mxu0 0.0
  %474 = vmatpush1.msra.mxu0 0.0
  %475 = vmatprep.subr.mxu0 0.0
  %476 = vmatpush1.msra.mxu0 0.0
  %477 = vmatprep.subr.mxu0 0.0
  %478 = vmatpush1.msra.mxu0 0.0
  %479 = vmatprep.subr.mxu0 0.0
  %480 = vmatpush1.msra.mxu0 0.0
  %481 = vmatprep.subr.mxu0 0.0
  %482 = vmatpush1.msra.mxu0 0.0
  %483 = vmatprep.subr.mxu0 0.0
  %484 = vmatpush1.msra.mxu0 0.0
  %485 = vmatprep.subr.mxu0 0.0
  %486 = vmatpush1.msra.mxu0 0.0
  %487 = vmatprep.subr.mxu0 0.0
  %488 = vmatpush1.msra.mxu0 0.0
  %489 = vmatprep.subr.mxu0 0.0
  %490 = vmatpush1.msra.mxu0 0.0
  %491 = vmatprep.subr.mxu0 0.0
  %492 = vmatpush1.msra.mxu0 0.0
  %493 = vmatprep.subr.mxu0 0.0
  %494 = vmatpush1.msra.mxu0 0.0
  %495 = vmatprep.subr.mxu0 0.0
  %496 = vmatpush1.msra.mxu0 0.0
  %497 = vmatprep.subr.mxu0 0.0
  %498 = vmatpush1.msra.mxu0 0.0
  %499 = vmatprep.subr.mxu0 0.0
  %500 = vmatpush1.msra.mxu0 0.0
  %501 = vmatprep.subr.mxu0 0.0
  %502 = vmatpush1.msra.mxu0 0.0
  %503 = vmatprep.subr.mxu0 0.0
  %504 = vmatpush1.msra.mxu0 0.0
  %505 = vmatprep.subr.mxu0 0.0
  %506 = vmatpush1.msra.mxu0 0.0
  %507 = vmatprep.subr.mxu0 0.0
  %508 = vmatpush1.msra.mxu0 0.0
  %509 = vmatprep.subr.mxu0 0.0
  %510 = vmatpush1.msra.mxu0 0.0
  %511 = vmatprep.subr.mxu0 0.0
  %512 = vmatpush1.msra.mxu0 0.0
  %513 = vmatprep.subr.mxu0 0.0
  %514 = vmatpush1.msra.mxu0 0.0
  %515 = vmatprep.subr.mxu0 0.0
  %516 = vmatpush1.msra.mxu0 0.0
  %517 = vmatprep.mubr.f32.mxu0 0.0
  %518 = vmatmul.mubr.f32.gmra.mrb[0].mxu0 %v307
  %v519 = vpop.f32.mrb[0].mxu0
  %v520 = vadd.f32 0.0, %v519
  %v521 = vpop.f32.mrb[0].mxu0
  %522 = vdwg.mxu0
  %v524 = vrot.slane %v520, 6
  %v526 = vadd.f32 %v123, %v524
  %v527 = vtanh.pop %v526
  %v529 = vrot.slane %v527, 2
  %v530 = vsel %vm160, %v529, 0
  %532 = vmatprep.subr.mxu0 0.0
  %533 = vmatpush1.msra.mxu0 %v139
  %534 = vmatprep.subr.mxu0 0.0
  %535 = vmatpush1.msra.mxu0 %v140
  %536 = vmatprep.subr.mxu0 0.0
  %537 = vmatpush1.msra.mxu0 %v141
  %538 = vmatprep.subr.mxu0 0.0
  %539 = vmatpush1.msra.mxu0 %v142
  %540 = vmatprep.subr.mxu0 0.0
  %541 = vmatpush1.msra.mxu0 %v143
  %542 = vmatprep.subr.mxu0 0.0
  %543 = vmatpush1.msra.mxu0 %v144
  %544 = vmatprep.subr.mxu0 0.0
  %545 = vmatpush1.msra.mxu0 %v145
  %546 = vmatprep.subr.mxu0 0.0
  %547 = vmatpush1.msra.mxu0 %v146
  %548 = vmatprep.subr.mxu0 0.0
  %549 = vmatpush1.msra.mxu0 0.0
  %550 = vmatprep.subr.mxu0 0.0
  %551 = vmatpush1.msra.mxu0 0.0
  %552 = vmatprep.subr.mxu0 0.0
  %553 = vmatpush1.msra.mxu0 0.0
  %554 = vmatprep.subr.mxu0 0.0
  %555 = vmatpush1.msra.mxu0 0.0
  %556 = vmatprep.subr.mxu0 0.0
  %557 = vmatpush1.msra.mxu0 0.0
  %558 = vmatprep.subr.mxu0 0.0
  %559 = vmatpush1.msra.mxu0 0.0
  %560 = vmatprep.subr.mxu0 0.0
  %561 = vmatpush1.msra.mxu0 0.0
  %562 = vmatprep.subr.mxu0 0.0
  %563 = vmatpush1.msra.mxu0 0.0
  %564 = vmatprep.subr.mxu0 0.0
  %565 = vmatpush1.msra.mxu0 0.0
  %566 = vmatprep.subr.mxu0 0.0
  %567 = vmatpush1.msra.mxu0 0.0
  %568 = vmatprep.subr.mxu0 0.0
  %569 = vmatpush1.msra.mxu0 0.0
  %570 = vmatprep.subr.mxu0 0.0
  %571 = vmatpush1.msra.mxu0 0.0
  %572 = vmatprep.subr.mxu0 0.0
  %573 = vmatpush1.msra.mxu0 0.0
  %574 = vmatprep.subr.mxu0 0.0
  %575 = vmatpush1.msra.mxu0 0.0
  %576 = vmatprep.subr.mxu0 0.0
  %577 = vmatpush1.msra.mxu0 0.0
  %578 = vmatprep.subr.mxu0 0.0
  %579 = vmatpush1.msra.mxu0 0.0
  %580 = vmatprep.subr.mxu0 0.0
  %581 = vmatpush1.msra.mxu0 0.0
  %582 = vmatprep.subr.mxu0 0.0
  %583 = vmatpush1.msra.mxu0 0.0
  %584 = vmatprep.subr.mxu0 0.0
  %585 = vmatpush1.msra.mxu0 0.0
  %586 = vmatprep.subr.mxu0 0.0
  %587 = vmatpush1.msra.mxu0 0.0
  %588 = vmatprep.subr.mxu0 0.0
  %589 = vmatpush1.msra.mxu0 0.0
  %590 = vmatprep.subr.mxu0 0.0
  %591 = vmatpush1.msra.mxu0 0.0
  %592 = vmatprep.subr.mxu0 0.0
  %593 = vmatpush1.msra.mxu0 0.0
  %594 = vmatprep.subr.mxu0 0.0
  %595 = vmatpush1.msra.mxu0 0.0
  %596 = vmatprep.mubr.f32.mxu0 0.0
  %597 = vmatmul.mubr.f32.gmra.mrb[0].mxu0 %v530
  %v598 = vpop.f32.mrb[0].mxu0
  %v599 = vadd.f32 %v450, %v598
  %v600 = vpop.f32.mrb[0].mxu0
  %601 = vdwg.mxu0
  %v602 = vtanh.pop %v599
  %v604 = vsel %vm160, %v602, 0
  %606 = vmatprep.subr.mxu0 0.0
  %607 = vmatpush1.msra.mxu0 %v147
  %608 = vmatprep.subr.mxu0 0.0
  %609 = vmatpush1.msra.mxu0 %v148
  %610 = vmatprep.subr.mxu0 0.0
  %611 = vmatpush1.msra.mxu0 %v149
  %612 = vmatprep.subr.mxu0 0.0
  %613 = vmatpush1.msra.mxu0 %v150
  %614 = vmatprep.subr.mxu0 0.0
  %615 = vmatpush1.msra.mxu0 %v151
  %616 = vmatprep.subr.mxu0 0.0
  %617 = vmatpush1.msra.mxu0 %v152
  %618 = vmatprep.subr.mxu0 0.0
  %619 = vmatpush1.msra.mxu0 %v153
  %620 = vmatprep.subr.mxu0 0.0
  %621 = vmatpush1.msra.mxu0 %v154
  %622 = vmatprep.subr.mxu0 0.0
  %623 = vmatpush1.msra.mxu0 0.0
  %624 = vmatprep.subr.mxu0 0.0
  %625 = vmatpush1.msra.mxu0 0.0
  %626 = vmatprep.subr.mxu0 0.0
  %627 = vmatpush1.msra.mxu0 0.0
  %628 = vmatprep.subr.mxu0 0.0
  %629 = vmatpush1.msra.mxu0 0.0
  %630 = vmatprep.subr.mxu0 0.0
  %631 = vmatpush1.msra.mxu0 0.0
  %632 = vmatprep.subr.mxu0 0.0
  %633 = vmatpush1.msra.mxu0 0.0
  %634 = vmatprep.subr.mxu0 0.0
  %635 = vmatpush1.msra.mxu0 0.0
  %636 = vmatprep.subr.mxu0 0.0
  %637 = vmatpush1.msra.mxu0 0.0
  %638 = vmatprep.subr.mxu0 0.0
  %639 = vmatpush1.msra.mxu0 0.0
  %640 = vmatprep.subr.mxu0 0.0
  %641 = vmatpush1.msra.mxu0 0.0
  %642 = vmatprep.subr.mxu0 0.0
  %643 = vmatpush1.msra.mxu0 0.0
  %644 = vmatprep.subr.mxu0 0.0
  %645 = vmatpush1.msra.mxu0 0.0
  %646 = vmatprep.subr.mxu0 0.0
  %647 = vmatpush1.msra.mxu0 0.0
  %648 = vmatprep.subr.mxu0 0.0
  %649 = vmatpush1.msra.mxu0 0.0
  %650 = vmatprep.subr.mxu0 0.0
  %651 = vmatpush1.msra.mxu0 0.0
  %652 = vmatprep.subr.mxu0 0.0
  %653 = vmatpush1.msra.mxu0 0.0
  %654 = vmatprep.subr.mxu0 0.0
  %655 = vmatpush1.msra.mxu0 0.0
  %656 = vmatprep.subr.mxu0 0.0
  %657 = vmatpush1.msra.mxu0 0.0
  %658 = vmatprep.subr.mxu0 0.0
  %659 = vmatpush1.msra.mxu0 0.0
  %660 = vmatprep.subr.mxu0 0.0
  %661 = vmatpush1.msra.mxu0 0.0
  %662 = vmatprep.subr.mxu0 0.0
  %663 = vmatpush1.msra.mxu0 0.0
  %664 = vmatprep.subr.mxu0 0.0
  %665 = vmatpush1.msra.mxu0 0.0
  %666 = vmatprep.subr.mxu0 0.0
  %667 = vmatpush1.msra.mxu0 0.0
  %668 = vmatprep.subr.mxu0 0.0
  %669 = vmatpush1.msra.mxu0 0.0
  %670 = vmatprep.mubr.f32.mxu0 0.0
  %671 = vmatmul.mubr.f32.gmra.mrb[0].mxu0 %v604
  %v672 = vpop.f32.mrb[0].mxu0
  %v673 = vadd.f32 %v159, %v672
  %v674 = vpop.f32.mrb[0].mxu0
  %675 = vdwg.mxu0
  %676 = vmatprep.subr.mxu0 0.0
  %677 = vmatpush1.msra.mxu0 %v131
  %678 = vmatprep.subr.mxu0 0.0
  %679 = vmatpush1.msra.mxu0 %v132
  %680 = vmatprep.subr.mxu0 0.0
  %681 = vmatpush1.msra.mxu0 %v133
  %682 = vmatprep.subr.mxu0 0.0
  %683 = vmatpush1.msra.mxu0 %v134
  %684 = vmatprep.subr.mxu0 0.0
  %685 = vmatpush1.msra.mxu0 %v135
  %686 = vmatprep.subr.mxu0 0.0
  %687 = vmatpush1.msra.mxu0 %v136
  %688 = vmatprep.subr.mxu0 0.0
  %689 = vmatpush1.msra.mxu0 %v137
  %690 = vmatprep.subr.mxu0 0.0
  %691 = vmatpush1.msra.mxu0 %v138
  %692 = vmatprep.subr.mxu0 0.0
  %693 = vmatpush1.msra.mxu0 0.0
  %694 = vmatprep.subr.mxu0 0.0
  %695 = vmatpush1.msra.mxu0 0.0
  %696 = vmatprep.subr.mxu0 0.0
  %697 = vmatpush1.msra.mxu0 0.0
  %698 = vmatprep.subr.mxu0 0.0
  %699 = vmatpush1.msra.mxu0 0.0
  %700 = vmatprep.subr.mxu0 0.0
  %701 = vmatpush1.msra.mxu0 0.0
  %702 = vmatprep.subr.mxu0 0.0
  %703 = vmatpush1.msra.mxu0 0.0
  %704 = vmatprep.subr.mxu0 0.0
  %705 = vmatpush1.msra.mxu0 0.0
  %706 = vmatprep.subr.mxu0 0.0
  %707 = vmatpush1.msra.mxu0 0.0
  %708 = vmatprep.subr.mxu0 0.0
  %709 = vmatpush1.msra.mxu0 0.0
  %710 = vmatprep.subr.mxu0 0.0
  %711 = vmatpush1.msra.mxu0 0.0
  %712 = vmatprep.subr.mxu0 0.0
  %713 = vmatpush1.msra.mxu0 0.0
  %714 = vmatprep.subr.mxu0 0.0
  %715 = vmatpush1.msra.mxu0 0.0
  %716 = vmatprep.subr.mxu0 0.0
  %717 = vmatpush1.msra.mxu0 0.0
  %718 = vmatprep.subr.mxu0 0.0
  %719 = vmatpush1.msra.mxu0 0.0
  %720 = vmatprep.subr.mxu0 0.0
  %721 = vmatpush1.msra.mxu0 0.0
  %722 = vmatprep.subr.mxu0 0.0
  %723 = vmatpush1.msra.mxu0 0.0
  %724 = vmatprep.subr.mxu0 0.0
  %725 = vmatpush1.msra.mxu0 0.0
  %726 = vmatprep.subr.mxu0 0.0
  %727 = vmatpush1.msra.mxu0 0.0
  %728 = vmatprep.subr.mxu0 0.0
  %729 = vmatpush1.msra.mxu0 0.0
  %730 = vmatprep.subr.mxu0 0.0
  %731 = vmatpush1.msra.mxu0 0.0
  %732 = vmatprep.subr.mxu0 0.0
  %733 = vmatpush1.msra.mxu0 0.0
  %734 = vmatprep.subr.mxu0 0.0
  %735 = vmatpush1.msra.mxu0 0.0
  %736 = vmatprep.subr.mxu0 0.0
  %737 = vmatpush1.msra.mxu0 0.0
  %738 = vmatprep.subr.mxu0 0.0
  %739 = vmatpush1.msra.mxu0 0.0
  %740 = vmatprep.mubr.f32.mxu0 0.0
  %741 = vmatmul.mubr.f32.gmra.mrb[0].mxu0 %v530
  %v742 = vpop.f32.mrb[0].mxu0
  %v743 = vadd.f32 0.0, %v742
  %v744 = vpop.f32.mrb[0].mxu0
  %745 = vdwg.mxu0
  %v747 = vrot.slane %v743, 4
  %v749 = vadd.f32 %v123, %v747
  %v750 = vtanh.pop %v749
  %v752 = vrot.slane %v750, 4
  %v753 = vsel %vm160, %v752, 0
  %755 = vmatprep.subr.mxu0 0.0
  %756 = vmatpush1.msra.mxu0 %v139
  %757 = vmatprep.subr.mxu0 0.0
  %758 = vmatpush1.msra.mxu0 %v140
  %759 = vmatprep.subr.mxu0 0.0
  %760 = vmatpush1.msra.mxu0 %v141
  %761 = vmatprep.subr.mxu0 0.0
  %762 = vmatpush1.msra.mxu0 %v142
  %763 = vmatprep.subr.mxu0 0.0
  %764 = vmatpush1.msra.mxu0 %v143
  %765 = vmatprep.subr.mxu0 0.0
  %766 = vmatpush1.msra.mxu0 %v144
  %767 = vmatprep.subr.mxu0 0.0
  %768 = vmatpush1.msra.mxu0 %v145
  %769 = vmatprep.subr.mxu0 0.0
  %770 = vmatpush1.msra.mxu0 %v146
  %771 = vmatprep.subr.mxu0 0.0
  %772 = vmatpush1.msra.mxu0 0.0
  %773 = vmatprep.subr.mxu0 0.0
  %774 = vmatpush1.msra.mxu0 0.0
  %775 = vmatprep.subr.mxu0 0.0
  %776 = vmatpush1.msra.mxu0 0.0
  %777 = vmatprep.subr.mxu0 0.0
  %778 = vmatpush1.msra.mxu0 0.0
  %779 = vmatprep.subr.mxu0 0.0
  %780 = vmatpush1.msra.mxu0 0.0
  %781 = vmatprep.subr.mxu0 0.0
  %782 = vmatpush1.msra.mxu0 0.0
  %783 = vmatprep.subr.mxu0 0.0
  %784 = vmatpush1.msra.mxu0 0.0
  %785 = vmatprep.subr.mxu0 0.0
  %786 = vmatpush1.msra.mxu0 0.0
  %787 = vmatprep.subr.mxu0 0.0
  %788 = vmatpush1.msra.mxu0 0.0
  %789 = vmatprep.subr.mxu0 0.0
  %790 = vmatpush1.msra.mxu0 0.0
  %791 = vmatprep.subr.mxu0 0.0
  %792 = vmatpush1.msra.mxu0 0.0
  %793 = vmatprep.subr.mxu0 0.0
  %794 = vmatpush1.msra.mxu0 0.0
  %795 = vmatprep.subr.mxu0 0.0
  %796 = vmatpush1.msra.mxu0 0.0
  %797 = vmatprep.subr.mxu0 0.0
  %798 = vmatpush1.msra.mxu0 0.0
  %799 = vmatprep.subr.mxu0 0.0
  %800 = vmatpush1.msra.mxu0 0.0
  %801 = vmatprep.subr.mxu0 0.0
  %802 = vmatpush1.msra.mxu0 0.0
  %803 = vmatprep.subr.mxu0 0.0
  %804 = vmatpush1.msra.mxu0 0.0
  %805 = vmatprep.subr.mxu0 0.0
  %806 = vmatpush1.msra.mxu0 0.0
  %807 = vmatprep.subr.mxu0 0.0
  %808 = vmatpush1.msra.mxu0 0.0
  %809 = vmatprep.subr.mxu0 0.0
  %810 = vmatpush1.msra.mxu0 0.0
  %811 = vmatprep.subr.mxu0 0.0
  %812 = vmatpush1.msra.mxu0 0.0
  %813 = vmatprep.subr.mxu0 0.0
  %814 = vmatpush1.msra.mxu0 0.0
  %815 = vmatprep.subr.mxu0 0.0
  %816 = vmatpush1.msra.mxu0 0.0
  %817 = vmatprep.subr.mxu0 0.0
  %818 = vmatpush1.msra.mxu0 0.0
  %819 = vmatprep.mubr.f32.mxu0 0.0
  %820 = vmatmul.mubr.f32.gmra.mrb[0].mxu0 %v753
  %v821 = vpop.f32.mrb[0].mxu0
  %v822 = vadd.f32 %v673, %v821
  %v823 = vpop.f32.mrb[0].mxu0
  %824 = vdwg.mxu0
  %v825 = vtanh.pop %v822
  %v827 = vsel %vm160, %v825, 0
  %829 = vmatprep.subr.mxu0 0.0
  %830 = vmatpush1.msra.mxu0 %v147
  %831 = vmatprep.subr.mxu0 0.0
  %832 = vmatpush1.msra.mxu0 %v148
  %833 = vmatprep.subr.mxu0 0.0
  %834 = vmatpush1.msra.mxu0 %v149
  %835 = vmatprep.subr.mxu0 0.0
  %836 = vmatpush1.msra.mxu0 %v150
  %837 = vmatprep.subr.mxu0 0.0
  %838 = vmatpush1.msra.mxu0 %v151
  %839 = vmatprep.subr.mxu0 0.0
  %840 = vmatpush1.msra.mxu0 %v152
  %841 = vmatprep.subr.mxu0 0.0
  %842 = vmatpush1.msra.mxu0 %v153
  %843 = vmatprep.subr.mxu0 0.0
  %844 = vmatpush1.msra.mxu0 %v154
  %845 = vmatprep.subr.mxu0 0.0
  %846 = vmatpush1.msra.mxu0 0.0
  %847 = vmatprep.subr.mxu0 0.0
  %848 = vmatpush1.msra.mxu0 0.0
  %849 = vmatprep.subr.mxu0 0.0
  %850 = vmatpush1.msra.mxu0 0.0
  %851 = vmatprep.subr.mxu0 0.0
  %852 = vmatpush1.msra.mxu0 0.0
  %853 = vmatprep.subr.mxu0 0.0
  %854 = vmatpush1.msra.mxu0 0.0
  %855 = vmatprep.subr.mxu0 0.0
  %856 = vmatpush1.msra.mxu0 0.0
  %857 = vmatprep.subr.mxu0 0.0
  %858 = vmatpush1.msra.mxu0 0.0
  %859 = vmatprep.subr.mxu0 0.0
  %860 = vmatpush1.msra.mxu0 0.0
  %861 = vmatprep.subr.mxu0 0.0
  %862 = vmatpush1.msra.mxu0 0.0
  %863 = vmatprep.subr.mxu0 0.0
  %864 = vmatpush1.msra.mxu0 0.0
  %865 = vmatprep.subr.mxu0 0.0
  %866 = vmatpush1.msra.mxu0 0.0
  %867 = vmatprep.subr.mxu0 0.0
  %868 = vmatpush1.msra.mxu0 0.0
  %869 = vmatprep.subr.mxu0 0.0
  %870 = vmatpush1.msra.mxu0 0.0
  %871 = vmatprep.subr.mxu0 0.0
  %872 = vmatpush1.msra.mxu0 0.0
  %873 = vmatprep.subr.mxu0 0.0
  %874 = vmatpush1.msra.mxu0 0.0
  %875 = vmatprep.subr.mxu0 0.0
  %876 = vmatpush1.msra.mxu0 0.0
  %877 = vmatprep.subr.mxu0 0.0
  %878 = vmatpush1.msra.mxu0 0.0
  %879 = vmatprep.subr.mxu0 0.0
  %880 = vmatpush1.msra.mxu0 0.0
  %881 = vmatprep.subr.mxu0 0.0
  %882 = vmatpush1.msra.mxu0 0.0
  %883 = vmatprep.subr.mxu0 0.0
  %884 = vmatpush1.msra.mxu0 0.0
  %885 = vmatprep.subr.mxu0 0.0
  %886 = vmatpush1.msra.mxu0 0.0
  %887 = vmatprep.subr.mxu0 0.0
  %888 = vmatpush1.msra.mxu0 0.0
  %889 = vmatprep.subr.mxu0 0.0
  %890 = vmatpush1.msra.mxu0 0.0
  %891 = vmatprep.subr.mxu0 0.0
  %892 = vmatpush1.msra.mxu0 0.0
  %893 = vmatprep.mubr.f32.mxu0 0.0
  %894 = vmatmul.mubr.f32.gmra.mrb[0].mxu0 %v827
  %v895 = vpop.f32.mrb[0].mxu0
  %v896 = vadd.f32 %v159, %v895
  %v897 = vpop.f32.mrb[0].mxu0
  %898 = vdwg.mxu0
  %899 = vmatprep.subr.mxu0 0.0
  %900 = vmatpush1.msra.mxu0 %v131
  %901 = vmatprep.subr.mxu0 0.0
  %902 = vmatpush1.msra.mxu0 %v132
  %903 = vmatprep.subr.mxu0 0.0
  %904 = vmatpush1.msra.mxu0 %v133
  %905 = vmatprep.subr.mxu0 0.0
  %906 = vmatpush1.msra.mxu0 %v134
  %907 = vmatprep.subr.mxu0 0.0
  %908 = vmatpush1.msra.mxu0 %v135
  %909 = vmatprep.subr.mxu0 0.0
  %910 = vmatpush1.msra.mxu0 %v136
  %911 = vmatprep.subr.mxu0 0.0
  %912 = vmatpush1.msra.mxu0 %v137
  %913 = vmatprep.subr.mxu0 0.0
  %914 = vmatpush1.msra.mxu0 %v138
  %915 = vmatprep.subr.mxu0 0.0
  %916 = vmatpush1.msra.mxu0 0.0
  %917 = vmatprep.subr.mxu0 0.0
  %918 = vmatpush1.msra.mxu0 0.0
  %919 = vmatprep.subr.mxu0 0.0
  %920 = vmatpush1.msra.mxu0 0.0
  %921 = vmatprep.subr.mxu0 0.0
  %922 = vmatpush1.msra.mxu0 0.0
  %923 = vmatprep.subr.mxu0 0.0
  %924 = vmatpush1.msra.mxu0 0.0
  %925 = vmatprep.subr.mxu0 0.0
  %926 = vmatpush1.msra.mxu0 0.0
  %927 = vmatprep.subr.mxu0 0.0
  %928 = vmatpush1.msra.mxu0 0.0
  %929 = vmatprep.subr.mxu0 0.0
  %930 = vmatpush1.msra.mxu0 0.0
  %931 = vmatprep.subr.mxu0 0.0
  %932 = vmatpush1.msra.mxu0 0.0
  %933 = vmatprep.subr.mxu0 0.0
  %934 = vmatpush1.msra.mxu0 0.0
  %935 = vmatprep.subr.mxu0 0.0
  %936 = vmatpush1.msra.mxu0 0.0
  %937 = vmatprep.subr.mxu0 0.0
  %938 = vmatpush1.msra.mxu0 0.0
  %939 = vmatprep.subr.mxu0 0.0
  %940 = vmatpush1.msra.mxu0 0.0
  %941 = vmatprep.subr.mxu0 0.0
  %942 = vmatpush1.msra.mxu0 0.0
  %943 = vmatprep.subr.mxu0 0.0
  %944 = vmatpush1.msra.mxu0 0.0
  %945 = vmatprep.subr.mxu0 0.0
  %946 = vmatpush1.msra.mxu0 0.0
  %947 = vmatprep.subr.mxu0 0.0
  %948 = vmatpush1.msra.mxu0 0.0
  %949 = vmatprep.subr.mxu0 0.0
  %950 = vmatpush1.msra.mxu0 0.0
  %951 = vmatprep.subr.mxu0 0.0
  %952 = vmatpush1.msra.mxu0 0.0
  %953 = vmatprep.subr.mxu0 0.0
  %954 = vmatpush1.msra.mxu0 0.0
  %955 = vmatprep.subr.mxu0 0.0
  %956 = vmatpush1.msra.mxu0 0.0
  %957 = vmatprep.subr.mxu0 0.0
  %958 = vmatpush1.msra.mxu0 0.0
  %959 = vmatprep.subr.mxu0 0.0
  %960 = vmatpush1.msra.mxu0 0.0
  %961 = vmatprep.subr.mxu0 0.0
  %962 = vmatpush1.msra.mxu0 0.0
  %963 = vmatprep.mubr.f32.mxu0 0.0
  %964 = vmatmul.mubr.f32.gmra.mrb[0].mxu0 %v753
  %v965 = vpop.f32.mrb[0].mxu0
  %v966 = vadd.f32 0.0, %v965
  %v967 = vpop.f32.mrb[0].mxu0
  %968 = vdwg.mxu0
  %v970 = vrot.slane %v966, 2
  %v972 = vadd.f32 %v123, %v970
  %v973 = vtanh.pop %v972
  %v975 = vrot.slane %v973, 6
  %v976 = vsel %vm160, %v975, 0
  %978 = vmatprep.subr.mxu0 0.0
  %979 = vmatpush1.msra.mxu0 %v139
  %980 = vmatprep.subr.mxu0 0.0
  %981 = vmatpush1.msra.mxu0 %v140
  %982 = vmatprep.subr.mxu0 0.0
  %983 = vmatpush1.msra.mxu0 %v141
  %984 = vmatprep.subr.mxu0 0.0
  %985 = vmatpush1.msra.mxu0 %v142
  %986 = vmatprep.subr.mxu0 0.0
  %987 = vmatpush1.msra.mxu0 %v143
  %988 = vmatprep.subr.mxu0 0.0
  %989 = vmatpush1.msra.mxu0 %v144
  %990 = vmatprep.subr.mxu0 0.0
  %991 = vmatpush1.msra.mxu0 %v145
  %992 = vmatprep.subr.mxu0 0.0
  %993 = vmatpush1.msra.mxu0 %v146
  %994 = vmatprep.subr.mxu0 0.0
  %995 = vmatpush1.msra.mxu0 0.0
  %996 = vmatprep.subr.mxu0 0.0
  %997 = vmatpush1.msra.mxu0 0.0
  %998 = vmatprep.subr.mxu0 0.0
  %999 = vmatpush1.msra.mxu0 0.0
  %1000 = vmatprep.subr.mxu0 0.0
  %1001 = vmatpush1.msra.mxu0 0.0
  %1002 = vmatprep.subr.mxu0 0.0
  %1003 = vmatpush1.msra.mxu0 0.0
  %1004 = vmatprep.subr.mxu0 0.0
  %1005 = vmatpush1.msra.mxu0 0.0
  %1006 = vmatprep.subr.mxu0 0.0
  %1007 = vmatpush1.msra.mxu0 0.0
  %1008 = vmatprep.subr.mxu0 0.0
  %1009 = vmatpush1.msra.mxu0 0.0
  %1010 = vmatprep.subr.mxu0 0.0
  %1011 = vmatpush1.msra.mxu0 0.0
  %1012 = vmatprep.subr.mxu0 0.0
  %1013 = vmatpush1.msra.mxu0 0.0
  %1014 = vmatprep.subr.mxu0 0.0
  %1015 = vmatpush1.msra.mxu0 0.0
  %1016 = vmatprep.subr.mxu0 0.0
  %1017 = vmatpush1.msra.mxu0 0.0
  %1018 = vmatprep.subr.mxu0 0.0
  %1019 = vmatpush1.msra.mxu0 0.0
  %1020 = vmatprep.subr.mxu0 0.0
  %1021 = vmatpush1.msra.mxu0 0.0
  %1022 = vmatprep.subr.mxu0 0.0
  %1023 = vmatpush1.msra.mxu0 0.0
  %1024 = vmatprep.subr.mxu0 0.0
  %1025 = vmatpush1.msra.mxu0 0.0
  %1026 = vmatprep.subr.mxu0 0.0
  %1027 = vmatpush1.msra.mxu0 0.0
  %1028 = vmatprep.subr.mxu0 0.0
  %1029 = vmatpush1.msra.mxu0 0.0
  %1030 = vmatprep.subr.mxu0 0.0
  %1031 = vmatpush1.msra.mxu0 0.0
  %1032 = vmatprep.subr.mxu0 0.0
  %1033 = vmatpush1.msra.mxu0 0.0
  %1034 = vmatprep.subr.mxu0 0.0
  %1035 = vmatpush1.msra.mxu0 0.0
  %1036 = vmatprep.subr.mxu0 0.0
  %1037 = vmatpush1.msra.mxu0 0.0
  %1038 = vmatprep.subr.mxu0 0.0
  %1039 = vmatpush1.msra.mxu0 0.0
  %1040 = vmatprep.subr.mxu0 0.0
  %1041 = vmatpush1.msra.mxu0 0.0
  %1042 = vmatprep.mubr.f32.mxu0 0.0
  %1043 = vmatmul.mubr.f32.gmra.mrb[0].mxu0 %v976
  %v1044 = vpop.f32.mrb[0].mxu0
  %v1045 = vadd.f32 %v896, %v1044
  %v1046 = vpop.f32.mrb[0].mxu0
  %1047 = vdwg.mxu0
  %v1048 = vtanh.pop %v1045
  %v1050 = vsel %vm160, %v1048, 0
  %1052 = vmatprep.subr.mxu0 0.0
  %1053 = vmatpush1.msra.mxu0 %v147
  %1054 = vmatprep.subr.mxu0 0.0
  %1055 = vmatpush1.msra.mxu0 %v148
  %1056 = vmatprep.subr.mxu0 0.0
  %1057 = vmatpush1.msra.mxu0 %v149
  %1058 = vmatprep.subr.mxu0 0.0
  %1059 = vmatpush1.msra.mxu0 %v150
  %1060 = vmatprep.subr.mxu0 0.0
  %1061 = vmatpush1.msra.mxu0 %v151
  %1062 = vmatprep.subr.mxu0 0.0
  %1063 = vmatpush1.msra.mxu0 %v152
  %1064 = vmatprep.subr.mxu0 0.0
  %1065 = vmatpush1.msra.mxu0 %v153
  %1066 = vmatprep.subr.mxu0 0.0
  %1067 = vmatpush1.msra.mxu0 %v154
  %1068 = vmatprep.subr.mxu0 0.0
  %1069 = vmatpush1.msra.mxu0 0.0
  %1070 = vmatprep.subr.mxu0 0.0
  %1071 = vmatpush1.msra.mxu0 0.0
  %1072 = vmatprep.subr.mxu0 0.0
  %1073 = vmatpush1.msra.mxu0 0.0
  %1074 = vmatprep.subr.mxu0 0.0
  %1075 = vmatpush1.msra.mxu0 0.0
  %1076 = vmatprep.subr.mxu0 0.0
  %1077 = vmatpush1.msra.mxu0 0.0
  %1078 = vmatprep.subr.mxu0 0.0
  %1079 = vmatpush1.msra.mxu0 0.0
  %1080 = vmatprep.subr.mxu0 0.0
  %1081 = vmatpush1.msra.mxu0 0.0
  %1082 = vmatprep.subr.mxu0 0.0
  %1083 = vmatpush1.msra.mxu0 0.0
  %1084 = vmatprep.subr.mxu0 0.0
  %1085 = vmatpush1.msra.mxu0 0.0
  %1086 = vmatprep.subr.mxu0 0.0
  %1087 = vmatpush1.msra.mxu0 0.0
  %1088 = vmatprep.subr.mxu0 0.0
  %1089 = vmatpush1.msra.mxu0 0.0
  %1090 = vmatprep.subr.mxu0 0.0
  %1091 = vmatpush1.msra.mxu0 0.0
  %1092 = vmatprep.subr.mxu0 0.0
  %1093 = vmatpush1.msra.mxu0 0.0
  %1094 = vmatprep.subr.mxu0 0.0
  %1095 = vmatpush1.msra.mxu0 0.0
  %1096 = vmatprep.subr.mxu0 0.0
  %1097 = vmatpush1.msra.mxu0 0.0
  %1098 = vmatprep.subr.mxu0 0.0
  %1099 = vmatpush1.msra.mxu0 0.0
  %1100 = vmatprep.subr.mxu0 0.0
  %1101 = vmatpush1.msra.mxu0 0.0
  %1102 = vmatprep.subr.mxu0 0.0
  %1103 = vmatpush1.msra.mxu0 0.0
  %1104 = vmatprep.subr.mxu0 0.0
  %1105 = vmatpush1.msra.mxu0 0.0
  %1106 = vmatprep.subr.mxu0 0.0
  %1107 = vmatpush1.msra.mxu0 0.0
  %1108 = vmatprep.subr.mxu0 0.0
  %1109 = vmatpush1.msra.mxu0 0.0
  %1110 = vmatprep.subr.mxu0 0.0
  %1111 = vmatpush1.msra.mxu0 0.0
  %1112 = vmatprep.subr.mxu0 0.0
  %1113 = vmatpush1.msra.mxu0 0.0
  %1114 = vmatprep.subr.mxu0 0.0
  %1115 = vmatpush1.msra.mxu0 0.0
  %1116 = vmatprep.mubr.f32.mxu0 0.0
  %1117 = vmatmul.mubr.f32.gmra.mrb[0].mxu0 %v1050
  %v1118 = vpop.f32.mrb[0].mxu0
  %v1119 = vadd.f32 %v159, %v1118
  %v1120 = vpop.f32.mrb[0].mxu0
  %1121 = vdwg.mxu0
  %1122 = vmatprep.subr.mxu0 0.0
  %1123 = vmatpush1.msra.mxu0 %v131
  %1124 = vmatprep.subr.mxu0 0.0
  %1125 = vmatpush1.msra.mxu0 %v132
  %1126 = vmatprep.subr.mxu0 0.0
  %1127 = vmatpush1.msra.mxu0 %v133
  %1128 = vmatprep.subr.mxu0 0.0
  %1129 = vmatpush1.msra.mxu0 %v134
  %1130 = vmatprep.subr.mxu0 0.0
  %1131 = vmatpush1.msra.mxu0 %v135
  %1132 = vmatprep.subr.mxu0 0.0
  %1133 = vmatpush1.msra.mxu0 %v136
  %1134 = vmatprep.subr.mxu0 0.0
  %1135 = vmatpush1.msra.mxu0 %v137
  %1136 = vmatprep.subr.mxu0 0.0
  %1137 = vmatpush1.msra.mxu0 %v138
  %1138 = vmatprep.subr.mxu0 0.0
  %1139 = vmatpush1.msra.mxu0 0.0
  %1140 = vmatprep.subr.mxu0 0.0
  %1141 = vmatpush1.msra.mxu0 0.0
  %1142 = vmatprep.subr.mxu0 0.0
  %1143 = vmatpush1.msra.mxu0 0.0
  %1144 = vmatprep.subr.mxu0 0.0
  %1145 = vmatpush1.msra.mxu0 0.0
  %1146 = vmatprep.subr.mxu0 0.0
  %1147 = vmatpush1.msra.mxu0 0.0
  %1148 = vmatprep.subr.mxu0 0.0
  %1149 = vmatpush1.msra.mxu0 0.0
  %1150 = vmatprep.subr.mxu0 0.0
  %1151 = vmatpush1.msra.mxu0 0.0
  %1152 = vmatprep.subr.mxu0 0.0
  %1153 = vmatpush1.msra.mxu0 0.0
  %1154 = vmatprep.subr.mxu0 0.0
  %1155 = vmatpush1.msra.mxu0 0.0
  %1156 = vmatprep.subr.mxu0 0.0
  %1157 = vmatpush1.msra.mxu0 0.0
  %1158 = vmatprep.subr.mxu0 0.0
  %1159 = vmatpush1.msra.mxu0 0.0
  %1160 = vmatprep.subr.mxu0 0.0
  %1161 = vmatpush1.msra.mxu0 0.0
  %1162 = vmatprep.subr.mxu0 0.0
  %1163 = vmatpush1.msra.mxu0 0.0
  %1164 = vmatprep.subr.mxu0 0.0
  %1165 = vmatpush1.msra.mxu0 0.0
  %1166 = vmatprep.subr.mxu0 0.0
  %1167 = vmatpush1.msra.mxu0 0.0
  %1168 = vmatprep.subr.mxu0 0.0
  %1169 = vmatpush1.msra.mxu0 0.0
  %1170 = vmatprep.subr.mxu0 0.0
  %1171 = vmatpush1.msra.mxu0 0.0
  %1172 = vmatprep.subr.mxu0 0.0
  %1173 = vmatpush1.msra.mxu0 0.0
  %1174 = vmatprep.subr.mxu0 0.0
  %1175 = vmatpush1.msra.mxu0 0.0
  %1176 = vmatprep.subr.mxu0 0.0
  %1177 = vmatpush1.msra.mxu0 0.0
  %1178 = vmatprep.subr.mxu0 0.0
  %1179 = vmatpush1.msra.mxu0 0.0
  %1180 = vmatprep.subr.mxu0 0.0
  %1181 = vmatpush1.msra.mxu0 0.0
  %1182 = vmatprep.subr.mxu0 0.0
  %1183 = vmatpush1.msra.mxu0 0.0
  %1184 = vmatprep.subr.mxu0 0.0
  %1185 = vmatpush1.msra.mxu0 0.0
  %1186 = vmatprep.mubr.f32.mxu0 0.0
  %1187 = vmatmul.mubr.f32.gmra.mrb[0].mxu0 %v976
  %v1188 = vpop.f32.mrb[0].mxu0
  %v1189 = vadd.f32 0.0, %v1188
  %v1190 = vpop.f32.mrb[0].mxu0
  %1191 = vdwg.mxu0
  %v1192 = vadd.f32 %v128, %v1189
  %v1193 = vtanh.pop %v1192
  %v1195 = vsel %vm160, %v1193, 0
  %1197 = vmatprep.subr.mxu0 0.0
  %1198 = vmatpush1.msra.mxu0 %v139
  %1199 = vmatprep.subr.mxu0 0.0
  %1200 = vmatpush1.msra.mxu0 %v140
  %1201 = vmatprep.subr.mxu0 0.0
  %1202 = vmatpush1.msra.mxu0 %v141
  %1203 = vmatprep.subr.mxu0 0.0
  %1204 = vmatpush1.msra.mxu0 %v142
  %1205 = vmatprep.subr.mxu0 0.0
  %1206 = vmatpush1.msra.mxu0 %v143
  %1207 = vmatprep.subr.mxu0 0.0
  %1208 = vmatpush1.msra.mxu0 %v144
  %1209 = vmatprep.subr.mxu0 0.0
  %1210 = vmatpush1.msra.mxu0 %v145
  %1211 = vmatprep.subr.mxu0 0.0
  %1212 = vmatpush1.msra.mxu0 %v146
  %1213 = vmatprep.subr.mxu0 0.0
  %1214 = vmatpush1.msra.mxu0 0.0
  %1215 = vmatprep.subr.mxu0 0.0
  %1216 = vmatpush1.msra.mxu0 0.0
  %1217 = vmatprep.subr.mxu0 0.0
  %1218 = vmatpush1.msra.mxu0 0.0
  %1219 = vmatprep.subr.mxu0 0.0
  %1220 = vmatpush1.msra.mxu0 0.0
  %1221 = vmatprep.subr.mxu0 0.0
  %1222 = vmatpush1.msra.mxu0 0.0
  %1223 = vmatprep.subr.mxu0 0.0
  %1224 = vmatpush1.msra.mxu0 0.0
  %1225 = vmatprep.subr.mxu0 0.0
  %1226 = vmatpush1.msra.mxu0 0.0
  %1227 = vmatprep.subr.mxu0 0.0
  %1228 = vmatpush1.msra.mxu0 0.0
  %1229 = vmatprep.subr.mxu0 0.0
  %1230 = vmatpush1.msra.mxu0 0.0
  %1231 = vmatprep.subr.mxu0 0.0
  %1232 = vmatpush1.msra.mxu0 0.0
  %1233 = vmatprep.subr.mxu0 0.0
  %1234 = vmatpush1.msra.mxu0 0.0
  %1235 = vmatprep.subr.mxu0 0.0
  %1236 = vmatpush1.msra.mxu0 0.0
  %1237 = vmatprep.subr.mxu0 0.0
  %1238 = vmatpush1.msra.mxu0 0.0
  %1239 = vmatprep.subr.mxu0 0.0
  %1240 = vmatpush1.msra.mxu0 0.0
  %1241 = vmatprep.subr.mxu0 0.0
  %1242 = vmatpush1.msra.mxu0 0.0
  %1243 = vmatprep.subr.mxu0 0.0
  %1244 = vmatpush1.msra.mxu0 0.0
  %1245 = vmatprep.subr.mxu0 0.0
  %1246 = vmatpush1.msra.mxu0 0.0
  %1247 = vmatprep.subr.mxu0 0.0
  %1248 = vmatpush1.msra.mxu0 0.0
  %1249 = vmatprep.subr.mxu0 0.0
  %1250 = vmatpush1.msra.mxu0 0.0
  %1251 = vmatprep.subr.mxu0 0.0
  %1252 = vmatpush1.msra.mxu0 0.0
  %1253 = vmatprep.subr.mxu0 0.0
  %1254 = vmatpush1.msra.mxu0 0.0
  %1255 = vmatprep.subr.mxu0 0.0
  %1256 = vmatpush1.msra.mxu0 0.0
  %1257 = vmatprep.subr.mxu0 0.0
  %1258 = vmatpush1.msra.mxu0 0.0
  %1259 = vmatprep.subr.mxu0 0.0
  %1260 = vmatpush1.msra.mxu0 0.0
  %1261 = vmatprep.mubr.f32.mxu0 0.0
  %1262 = vmatmul.mubr.f32.gmra.mrb[0].mxu0 %v1195
  %v1263 = vpop.f32.mrb[0].mxu0
  %v1264 = vadd.f32 %v1119, %v1263
  %v1265 = vpop.f32.mrb[0].mxu0
  %1266 = vdwg.mxu0
  %v1267 = vtanh.pop %v1264
  %v1269 = vsel %vm160, %v1267, 0
  %1271 = vmatprep.subr.mxu0 0.0
  %1272 = vmatpush1.msra.mxu0 %v147
  %1273 = vmatprep.subr.mxu0 0.0
  %1274 = vmatpush1.msra.mxu0 %v148
  %1275 = vmatprep.subr.mxu0 0.0
  %1276 = vmatpush1.msra.mxu0 %v149
  %1277 = vmatprep.subr.mxu0 0.0
  %1278 = vmatpush1.msra.mxu0 %v150
  %1279 = vmatprep.subr.mxu0 0.0
  %1280 = vmatpush1.msra.mxu0 %v151
  %1281 = vmatprep.subr.mxu0 0.0
  %1282 = vmatpush1.msra.mxu0 %v152
  %1283 = vmatprep.subr.mxu0 0.0
  %1284 = vmatpush1.msra.mxu0 %v153
  %1285 = vmatprep.subr.mxu0 0.0
  %1286 = vmatpush1.msra.mxu0 %v154
  %1287 = vmatprep.subr.mxu0 0.0
  %1288 = vmatpush1.msra.mxu0 0.0
  %1289 = vmatprep.subr.mxu0 0.0
  %1290 = vmatpush1.msra.mxu0 0.0
  %1291 = vmatprep.subr.mxu0 0.0
  %1292 = vmatpush1.msra.mxu0 0.0
  %1293 = vmatprep.subr.mxu0 0.0
  %1294 = vmatpush1.msra.mxu0 0.0
  %1295 = vmatprep.subr.mxu0 0.0
  %1296 = vmatpush1.msra.mxu0 0.0
  %1297 = vmatprep.subr.mxu0 0.0
  %1298 = vmatpush1.msra.mxu0 0.0
  %1299 = vmatprep.subr.mxu0 0.0
  %1300 = vmatpush1.msra.mxu0 0.0
  %1301 = vmatprep.subr.mxu0 0.0
  %1302 = vmatpush1.msra.mxu0 0.0
  %1303 = vmatprep.subr.mxu0 0.0
  %1304 = vmatpush1.msra.mxu0 0.0
  %1305 = vmatprep.subr.mxu0 0.0
  %1306 = vmatpush1.msra.mxu0 0.0
  %1307 = vmatprep.subr.mxu0 0.0
  %1308 = vmatpush1.msra.mxu0 0.0
  %1309 = vmatprep.subr.mxu0 0.0
  %1310 = vmatpush1.msra.mxu0 0.0
  %1311 = vmatprep.subr.mxu0 0.0
  %1312 = vmatpush1.msra.mxu0 0.0
  %1313 = vmatprep.subr.mxu0 0.0
  %1314 = vmatpush1.msra.mxu0 0.0
  %1315 = vmatprep.subr.mxu0 0.0
  %1316 = vmatpush1.msra.mxu0 0.0
  %1317 = vmatprep.subr.mxu0 0.0
  %1318 = vmatpush1.msra.mxu0 0.0
  %1319 = vmatprep.subr.mxu0 0.0
  %1320 = vmatpush1.msra.mxu0 0.0
  %1321 = vmatprep.subr.mxu0 0.0
  %1322 = vmatpush1.msra.mxu0 0.0
  %1323 = vmatprep.subr.mxu0 0.0
  %1324 = vmatpush1.msra.mxu0 0.0
  %1325 = vmatprep.subr.mxu0 0.0
  %1326 = vmatpush1.msra.mxu0 0.0
  %1327 = vmatprep.subr.mxu0 0.0
  %1328 = vmatpush1.msra.mxu0 0.0
  %1329 = vmatprep.subr.mxu0 0.0
  %1330 = vmatpush1.msra.mxu0 0.0
  %1331 = vmatprep.subr.mxu0 0.0
  %1332 = vmatpush1.msra.mxu0 0.0
  %1333 = vmatprep.subr.mxu0 0.0
  %1334 = vmatpush1.msra.mxu0 0.0
  %1335 = vmatprep.mubr.f32.mxu0 0.0
  %1336 = vmatmul.mubr.f32.gmra.mrb[0].mxu0 %v1269
  %v1337 = vpop.f32.mrb[0].mxu0
  %v1338 = vadd.f32 %v159, %v1337
  %v1339 = vpop.f32.mrb[0].mxu0
  %1340 = vdwg.mxu0
  %1341 = vmatprep.subr.mxu0 0.0
  %1342 = vmatpush1.msra.mxu0 %v131
  %1343 = vmatprep.subr.mxu0 0.0
  %1344 = vmatpush1.msra.mxu0 %v132
  %1345 = vmatprep.subr.mxu0 0.0
  %1346 = vmatpush1.msra.mxu0 %v133
  %1347 = vmatprep.subr.mxu0 0.0
  %1348 = vmatpush1.msra.mxu0 %v134
  %1349 = vmatprep.subr.mxu0 0.0
  %1350 = vmatpush1.msra.mxu0 %v135
  %1351 = vmatprep.subr.mxu0 0.0
  %1352 = vmatpush1.msra.mxu0 %v136
  %1353 = vmatprep.subr.mxu0 0.0
  %1354 = vmatpush1.msra.mxu0 %v137
  %1355 = vmatprep.subr.mxu0 0.0
  %1356 = vmatpush1.msra.mxu0 %v138
  %1357 = vmatprep.subr.mxu0 0.0
  %1358 = vmatpush1.msra.mxu0 0.0
  %1359 = vmatprep.subr.mxu0 0.0
  %1360 = vmatpush1.msra.mxu0 0.0
  %1361 = vmatprep.subr.mxu0 0.0
  %1362 = vmatpush1.msra.mxu0 0.0
  %1363 = vmatprep.subr.mxu0 0.0
  %1364 = vmatpush1.msra.mxu0 0.0
  %1365 = vmatprep.subr.mxu0 0.0
  %1366 = vmatpush1.msra.mxu0 0.0
  %1367 = vmatprep.subr.mxu0 0.0
  %1368 = vmatpush1.msra.mxu0 0.0
  %1369 = vmatprep.subr.mxu0 0.0
  %1370 = vmatpush1.msra.mxu0 0.0
  %1371 = vmatprep.subr.mxu0 0.0
  %1372 = vmatpush1.msra.mxu0 0.0
  %1373 = vmatprep.subr.mxu0 0.0
  %1374 = vmatpush1.msra.mxu0 0.0
  %1375 = vmatprep.subr.mxu0 0.0
  %1376 = vmatpush1.msra.mxu0 0.0
  %1377 = vmatprep.subr.mxu0 0.0
  %1378 = vmatpush1.msra.mxu0 0.0
  %1379 = vmatprep.subr.mxu0 0.0
  %1380 = vmatpush1.msra.mxu0 0.0
  %1381 = vmatprep.subr.mxu0 0.0
  %1382 = vmatpush1.msra.mxu0 0.0
  %1383 = vmatprep.subr.mxu0 0.0
  %1384 = vmatpush1.msra.mxu0 0.0
  %1385 = vmatprep.subr.mxu0 0.0
  %1386 = vmatpush1.msra.mxu0 0.0
  %1387 = vmatprep.subr.mxu0 0.0
  %1388 = vmatpush1.msra.mxu0 0.0
  %1389 = vmatprep.subr.mxu0 0.0
  %1390 = vmatpush1.msra.mxu0 0.0
  %1391 = vmatprep.subr.mxu0 0.0
  %1392 = vmatpush1.msra.mxu0 0.0
  %1393 = vmatprep.subr.mxu0 0.0
  %1394 = vmatpush1.msra.mxu0 0.0
  %1395 = vmatprep.subr.mxu0 0.0
  %1396 = vmatpush1.msra.mxu0 0.0
  %1397 = vmatprep.subr.mxu0 0.0
  %1398 = vmatpush1.msra.mxu0 0.0
  %1399 = vmatprep.subr.mxu0 0.0
  %1400 = vmatpush1.msra.mxu0 0.0
  %1401 = vmatprep.subr.mxu0 0.0
  %1402 = vmatpush1.msra.mxu0 0.0
  %1403 = vmatprep.subr.mxu0 0.0
  %1404 = vmatpush1.msra.mxu0 0.0
  %1405 = vmatprep.mubr.f32.mxu0 0.0
  %1406 = vmatmul.mubr.f32.gmra.mrb[0].mxu0 %v1195
  %v1407 = vpop.f32.mrb[0].mxu0
  %v1408 = vadd.f32 0.0, %v1407
  %v1409 = vpop.f32.mrb[0].mxu0
  %1410 = vdwg.mxu0
  %v1412 = vrot.slane %v1408, 6
  %v1414 = vadd.f32 %v128, %v1412
  %v1415 = vtanh.pop %v1414
  %v1417 = vrot.slane %v1415, 2
  %v1418 = vsel %vm160, %v1417, 0
  %1420 = vmatprep.subr.mxu0 0.0
  %1421 = vmatpush1.msra.mxu0 %v139
  %1422 = vmatprep.subr.mxu0 0.0
  %1423 = vmatpush1.msra.mxu0 %v140
  %1424 = vmatprep.subr.mxu0 0.0
  %1425 = vmatpush1.msra.mxu0 %v141
  %1426 = vmatprep.subr.mxu0 0.0
  %1427 = vmatpush1.msra.mxu0 %v142
  %1428 = vmatprep.subr.mxu0 0.0
  %1429 = vmatpush1.msra.mxu0 %v143
  %1430 = vmatprep.subr.mxu0 0.0
  %1431 = vmatpush1.msra.mxu0 %v144
  %1432 = vmatprep.subr.mxu0 0.0
  %1433 = vmatpush1.msra.mxu0 %v145
  %1434 = vmatprep.subr.mxu0 0.0
  %1435 = vmatpush1.msra.mxu0 %v146
  %1436 = vmatprep.subr.mxu0 0.0
  %1437 = vmatpush1.msra.mxu0 0.0
  %1438 = vmatprep.subr.mxu0 0.0
  %1439 = vmatpush1.msra.mxu0 0.0
  %1440 = vmatprep.subr.mxu0 0.0
  %1441 = vmatpush1.msra.mxu0 0.0
  %1442 = vmatprep.subr.mxu0 0.0
  %1443 = vmatpush1.msra.mxu0 0.0
  %1444 = vmatprep.subr.mxu0 0.0
  %1445 = vmatpush1.msra.mxu0 0.0
  %1446 = vmatprep.subr.mxu0 0.0
  %1447 = vmatpush1.msra.mxu0 0.0
  %1448 = vmatprep.subr.mxu0 0.0
  %1449 = vmatpush1.msra.mxu0 0.0
  %1450 = vmatprep.subr.mxu0 0.0
  %1451 = vmatpush1.msra.mxu0 0.0
  %1452 = vmatprep.subr.mxu0 0.0
  %1453 = vmatpush1.msra.mxu0 0.0
  %1454 = vmatprep.subr.mxu0 0.0
  %1455 = vmatpush1.msra.mxu0 0.0
  %1456 = vmatprep.subr.mxu0 0.0
  %1457 = vmatpush1.msra.mxu0 0.0
  %1458 = vmatprep.subr.mxu0 0.0
  %1459 = vmatpush1.msra.mxu0 0.0
  %1460 = vmatprep.subr.mxu0 0.0
  %1461 = vmatpush1.msra.mxu0 0.0
  %1462 = vmatprep.subr.mxu0 0.0
  %1463 = vmatpush1.msra.mxu0 0.0
  %1464 = vmatprep.subr.mxu0 0.0
  %1465 = vmatpush1.msra.mxu0 0.0
  %1466 = vmatprep.subr.mxu0 0.0
  %1467 = vmatpush1.msra.mxu0 0.0
  %1468 = vmatprep.subr.mxu0 0.0
  %1469 = vmatpush1.msra.mxu0 0.0
  %1470 = vmatprep.subr.mxu0 0.0
  %1471 = vmatpush1.msra.mxu0 0.0
  %1472 = vmatprep.subr.mxu0 0.0
  %1473 = vmatpush1.msra.mxu0 0.0
  %1474 = vmatprep.subr.mxu0 0.0
  %1475 = vmatpush1.msra.mxu0 0.0
  %1476 = vmatprep.subr.mxu0 0.0
  %1477 = vmatpush1.msra.mxu0 0.0
  %1478 = vmatprep.subr.mxu0 0.0
  %1479 = vmatpush1.msra.mxu0 0.0
  %1480 = vmatprep.subr.mxu0 0.0
  %1481 = vmatpush1.msra.mxu0 0.0
  %1482 = vmatprep.subr.mxu0 0.0
  %1483 = vmatpush1.msra.mxu0 0.0
  %1484 = vmatprep.mubr.f32.mxu0 0.0
  %1485 = vmatmul.mubr.f32.gmra.mrb[0].mxu0 %v1418
  %v1486 = vpop.f32.mrb[0].mxu0
  %v1487 = vadd.f32 %v1338, %v1486
  %v1488 = vpop.f32.mrb[0].mxu0
  %1489 = vdwg.mxu0
  %v1490 = vtanh.pop %v1487
  %v1492 = vsel %vm160, %v1490, 0
  %1494 = vmatprep.subr.mxu0 0.0
  %1495 = vmatpush1.msra.mxu0 %v147
  %1496 = vmatprep.subr.mxu0 0.0
  %1497 = vmatpush1.msra.mxu0 %v148
  %1498 = vmatprep.subr.mxu0 0.0
  %1499 = vmatpush1.msra.mxu0 %v149
  %1500 = vmatprep.subr.mxu0 0.0
  %1501 = vmatpush1.msra.mxu0 %v150
  %1502 = vmatprep.subr.mxu0 0.0
  %1503 = vmatpush1.msra.mxu0 %v151
  %1504 = vmatprep.subr.mxu0 0.0
  %1505 = vmatpush1.msra.mxu0 %v152
  %1506 = vmatprep.subr.mxu0 0.0
  %1507 = vmatpush1.msra.mxu0 %v153
  %1508 = vmatprep.subr.mxu0 0.0
  %1509 = vmatpush1.msra.mxu0 %v154
  %1510 = vmatprep.subr.mxu0 0.0
  %1511 = vmatpush1.msra.mxu0 0.0
  %1512 = vmatprep.subr.mxu0 0.0
  %1513 = vmatpush1.msra.mxu0 0.0
  %1514 = vmatprep.subr.mxu0 0.0
  %1515 = vmatpush1.msra.mxu0 0.0
  %1516 = vmatprep.subr.mxu0 0.0
  %1517 = vmatpush1.msra.mxu0 0.0
  %1518 = vmatprep.subr.mxu0 0.0
  %1519 = vmatpush1.msra.mxu0 0.0
  %1520 = vmatprep.subr.mxu0 0.0
  %1521 = vmatpush1.msra.mxu0 0.0
  %1522 = vmatprep.subr.mxu0 0.0
  %1523 = vmatpush1.msra.mxu0 0.0
  %1524 = vmatprep.subr.mxu0 0.0
  %1525 = vmatpush1.msra.mxu0 0.0
  %1526 = vmatprep.subr.mxu0 0.0
  %1527 = vmatpush1.msra.mxu0 0.0
  %1528 = vmatprep.subr.mxu0 0.0
  %1529 = vmatpush1.msra.mxu0 0.0
  %1530 = vmatprep.subr.mxu0 0.0
  %1531 = vmatpush1.msra.mxu0 0.0
  %1532 = vmatprep.subr.mxu0 0.0
  %1533 = vmatpush1.msra.mxu0 0.0
  %1534 = vmatprep.subr.mxu0 0.0
  %1535 = vmatpush1.msra.mxu0 0.0
  %1536 = vmatprep.subr.mxu0 0.0
  %1537 = vmatpush1.msra.mxu0 0.0
  %1538 = vmatprep.subr.mxu0 0.0
  %1539 = vmatpush1.msra.mxu0 0.0
  %1540 = vmatprep.subr.mxu0 0.0
  %1541 = vmatpush1.msra.mxu0 0.0
  %1542 = vmatprep.subr.mxu0 0.0
  %1543 = vmatpush1.msra.mxu0 0.0
  %1544 = vmatprep.subr.mxu0 0.0
  %1545 = vmatpush1.msra.mxu0 0.0
  %1546 = vmatprep.subr.mxu0 0.0
  %1547 = vmatpush1.msra.mxu0 0.0
  %1548 = vmatprep.subr.mxu0 0.0
  %1549 = vmatpush1.msra.mxu0 0.0
  %1550 = vmatprep.subr.mxu0 0.0
  %1551 = vmatpush1.msra.mxu0 0.0
  %1552 = vmatprep.subr.mxu0 0.0
  %1553 = vmatpush1.msra.mxu0 0.0
  %1554 = vmatprep.subr.mxu0 0.0
  %1555 = vmatpush1.msra.mxu0 0.0
  %1556 = vmatprep.subr.mxu0 0.0
  %1557 = vmatpush1.msra.mxu0 0.0
  %1558 = vmatprep.mubr.f32.mxu0 0.0
  %1559 = vmatmul.mubr.f32.gmra.mrb[0].mxu0 %v1492
  %v1560 = vpop.f32.mrb[0].mxu0
  %v1561 = vadd.f32 %v159, %v1560
  %v1562 = vpop.f32.mrb[0].mxu0
  %1563 = vdwg.mxu0
  %1564 = vmatprep.subr.mxu0 0.0
  %1565 = vmatpush1.msra.mxu0 %v131
  %1566 = vmatprep.subr.mxu0 0.0
  %1567 = vmatpush1.msra.mxu0 %v132
  %1568 = vmatprep.subr.mxu0 0.0
  %1569 = vmatpush1.msra.mxu0 %v133
  %1570 = vmatprep.subr.mxu0 0.0
  %1571 = vmatpush1.msra.mxu0 %v134
  %1572 = vmatprep.subr.mxu0 0.0
  %1573 = vmatpush1.msra.mxu0 %v135
  %1574 = vmatprep.subr.mxu0 0.0
  %1575 = vmatpush1.msra.mxu0 %v136
  %1576 = vmatprep.subr.mxu0 0.0
  %1577 = vmatpush1.msra.mxu0 %v137
  %1578 = vmatprep.subr.mxu0 0.0
  %1579 = vmatpush1.msra.mxu0 %v138
  %1580 = vmatprep.subr.mxu0 0.0
  %1581 = vmatpush1.msra.mxu0 0.0
  %1582 = vmatprep.subr.mxu0 0.0
  %1583 = vmatpush1.msra.mxu0 0.0
  %1584 = vmatprep.subr.mxu0 0.0
  %1585 = vmatpush1.msra.mxu0 0.0
  %1586 = vmatprep.subr.mxu0 0.0
  %1587 = vmatpush1.msra.mxu0 0.0
  %1588 = vmatprep.subr.mxu0 0.0
  %1589 = vmatpush1.msra.mxu0 0.0
  %1590 = vmatprep.subr.mxu0 0.0
  %1591 = vmatpush1.msra.mxu0 0.0
  %1592 = vmatprep.subr.mxu0 0.0
  %1593 = vmatpush1.msra.mxu0 0.0
  %1594 = vmatprep.subr.mxu0 0.0
  %1595 = vmatpush1.msra.mxu0 0.0
  %1596 = vmatprep.subr.mxu0 0.0
  %1597 = vmatpush1.msra.mxu0 0.0
  %1598 = vmatprep.subr.mxu0 0.0
  %1599 = vmatpush1.msra.mxu0 0.0
  %1600 = vmatprep.subr.mxu0 0.0
  %1601 = vmatpush1.msra.mxu0 0.0
  %1602 = vmatprep.subr.mxu0 0.0
  %1603 = vmatpush1.msra.mxu0 0.0
  %1604 = vmatprep.subr.mxu0 0.0
  %1605 = vmatpush1.msra.mxu0 0.0
  %1606 = vmatprep.subr.mxu0 0.0
  %1607 = vmatpush1.msra.mxu0 0.0
  %1608 = vmatprep.subr.mxu0 0.0
  %1609 = vmatpush1.msra.mxu0 0.0
  %1610 = vmatprep.subr.mxu0 0.0
  %1611 = vmatpush1.msra.mxu0 0.0
  %1612 = vmatprep.subr.mxu0 0.0
  %1613 = vmatpush1.msra.mxu0 0.0
  %1614 = vmatprep.subr.mxu0 0.0
  %1615 = vmatpush1.msra.mxu0 0.0
  %1616 = vmatprep.subr.mxu0 0.0
  %1617 = vmatpush1.msra.mxu0 0.0
  %1618 = vmatprep.subr.mxu0 0.0
  %1619 = vmatpush1.msra.mxu0 0.0
  %1620 = vmatprep.subr.mxu0 0.0
  %1621 = vmatpush1.msra.mxu0 0.0
  %1622 = vmatprep.subr.mxu0 0.0
  %1623 = vmatpush1.msra.mxu0 0.0
  %1624 = vmatprep.subr.mxu0 0.0
  %1625 = vmatpush1.msra.mxu0 0.0
  %1626 = vmatprep.subr.mxu0 0.0
  %1627 = vmatpush1.msra.mxu0 0.0
  %1628 = vmatprep.mubr.f32.mxu0 0.0
  %1629 = vmatmul.mubr.f32.gmra.mrb[0].mxu0 %v1418
  %v1630 = vpop.f32.mrb[0].mxu0
  %v1631 = vadd.f32 0.0, %v1630
  %v1632 = vpop.f32.mrb[0].mxu0
  %1633 = vdwg.mxu0
  %v1635 = vrot.slane %v1631, 4
  %v1637 = vadd.f32 %v128, %v1635
  %v1638 = vtanh.pop %v1637
  %v1640 = vrot.slane %v1638, 4
  %v1641 = vsel %vm160, %v1640, 0
  %1643 = vmatprep.subr.mxu0 0.0
  %1644 = vmatpush1.msra.mxu0 %v139
  %1645 = vmatprep.subr.mxu0 0.0
  %1646 = vmatpush1.msra.mxu0 %v140
  %1647 = vmatprep.subr.mxu0 0.0
  %1648 = vmatpush1.msra.mxu0 %v141
  %1649 = vmatprep.subr.mxu0 0.0
  %1650 = vmatpush1.msra.mxu0 %v142
  %1651 = vmatprep.subr.mxu0 0.0
  %1652 = vmatpush1.msra.mxu0 %v143
  %1653 = vmatprep.subr.mxu0 0.0
  %1654 = vmatpush1.msra.mxu0 %v144
  %1655 = vmatprep.subr.mxu0 0.0
  %1656 = vmatpush1.msra.mxu0 %v145
  %1657 = vmatprep.subr.mxu0 0.0
  %1658 = vmatpush1.msra.mxu0 %v146
  %1659 = vmatprep.subr.mxu0 0.0
  %1660 = vmatpush1.msra.mxu0 0.0
  %1661 = vmatprep.subr.mxu0 0.0
  %1662 = vmatpush1.msra.mxu0 0.0
  %1663 = vmatprep.subr.mxu0 0.0
  %1664 = vmatpush1.msra.mxu0 0.0
  %1665 = vmatprep.subr.mxu0 0.0
  %1666 = vmatpush1.msra.mxu0 0.0
  %1667 = vmatprep.subr.mxu0 0.0
  %1668 = vmatpush1.msra.mxu0 0.0
  %1669 = vmatprep.subr.mxu0 0.0
  %1670 = vmatpush1.msra.mxu0 0.0
  %1671 = vmatprep.subr.mxu0 0.0
  %1672 = vmatpush1.msra.mxu0 0.0
  %1673 = vmatprep.subr.mxu0 0.0
  %1674 = vmatpush1.msra.mxu0 0.0
  %1675 = vmatprep.subr.mxu0 0.0
  %1676 = vmatpush1.msra.mxu0 0.0
  %1677 = vmatprep.subr.mxu0 0.0
  %1678 = vmatpush1.msra.mxu0 0.0
  %1679 = vmatprep.subr.mxu0 0.0
  %1680 = vmatpush1.msra.mxu0 0.0
  %1681 = vmatprep.subr.mxu0 0.0
  %1682 = vmatpush1.msra.mxu0 0.0
  %1683 = vmatprep.subr.mxu0 0.0
  %1684 = vmatpush1.msra.mxu0 0.0
  %1685 = vmatprep.subr.mxu0 0.0
  %1686 = vmatpush1.msra.mxu0 0.0
  %1687 = vmatprep.subr.mxu0 0.0
  %1688 = vmatpush1.msra.mxu0 0.0
  %1689 = vmatprep.subr.mxu0 0.0
  %1690 = vmatpush1.msra.mxu0 0.0
  %1691 = vmatprep.subr.mxu0 0.0
  %1692 = vmatpush1.msra.mxu0 0.0
  %1693 = vmatprep.subr.mxu0 0.0
  %1694 = vmatpush1.msra.mxu0 0.0
  %1695 = vmatprep.subr.mxu0 0.0
  %1696 = vmatpush1.msra.mxu0 0.0
  %1697 = vmatprep.subr.mxu0 0.0
  %1698 = vmatpush1.msra.mxu0 0.0
  %1699 = vmatprep.subr.mxu0 0.0
  %1700 = vmatpush1.msra.mxu0 0.0
  %1701 = vmatprep.subr.mxu0 0.0
  %1702 = vmatpush1.msra.mxu0 0.0
  %1703 = vmatprep.subr.mxu0 0.0
  %1704 = vmatpush1.msra.mxu0 0.0
  %1705 = vmatprep.subr.mxu0 0.0
  %1706 = vmatpush1.msra.mxu0 0.0
  %1707 = vmatprep.mubr.f32.mxu0 0.0
  %1708 = vmatmul.mubr.f32.gmra.mrb[0].mxu0 %v1641
  %v1709 = vpop.f32.mrb[0].mxu0
  %v1710 = vadd.f32 %v1561, %v1709
  %v1711 = vpop.f32.mrb[0].mxu0
  %1712 = vdwg.mxu0
  %v1713 = vtanh.pop %v1710
  %v1715 = vsel %vm160, %v1713, 0
  %1717 = vmatprep.subr.mxu0 0.0
  %1718 = vmatpush1.msra.mxu0 %v147
  %1719 = vmatprep.subr.mxu0 0.0
  %1720 = vmatpush1.msra.mxu0 %v148
  %1721 = vmatprep.subr.mxu0 0.0
  %1722 = vmatpush1.msra.mxu0 %v149
  %1723 = vmatprep.subr.mxu0 0.0
  %1724 = vmatpush1.msra.mxu0 %v150
  %1725 = vmatprep.subr.mxu0 0.0
  %1726 = vmatpush1.msra.mxu0 %v151
  %1727 = vmatprep.subr.mxu0 0.0
  %1728 = vmatpush1.msra.mxu0 %v152
  %1729 = vmatprep.subr.mxu0 0.0
  %1730 = vmatpush1.msra.mxu0 %v153
  %1731 = vmatprep.subr.mxu0 0.0
  %1732 = vmatpush1.msra.mxu0 %v154
  %1733 = vmatprep.subr.mxu0 0.0
  %1734 = vmatpush1.msra.mxu0 0.0
  %1735 = vmatprep.subr.mxu0 0.0
  %1736 = vmatpush1.msra.mxu0 0.0
  %1737 = vmatprep.subr.mxu0 0.0
  %1738 = vmatpush1.msra.mxu0 0.0
  %1739 = vmatprep.subr.mxu0 0.0
  %1740 = vmatpush1.msra.mxu0 0.0
  %1741 = vmatprep.subr.mxu0 0.0
  %1742 = vmatpush1.msra.mxu0 0.0
  %1743 = vmatprep.subr.mxu0 0.0
  %1744 = vmatpush1.msra.mxu0 0.0
  %1745 = vmatprep.subr.mxu0 0.0
  %1746 = vmatpush1.msra.mxu0 0.0
  %1747 = vmatprep.subr.mxu0 0.0
  %1748 = vmatpush1.msra.mxu0 0.0
  %1749 = vmatprep.subr.mxu0 0.0
  %1750 = vmatpush1.msra.mxu0 0.0
  %1751 = vmatprep.subr.mxu0 0.0
  %1752 = vmatpush1.msra.mxu0 0.0
  %1753 = vmatprep.subr.mxu0 0.0
  %1754 = vmatpush1.msra.mxu0 0.0
  %1755 = vmatprep.subr.mxu0 0.0
  %1756 = vmatpush1.msra.mxu0 0.0
  %1757 = vmatprep.subr.mxu0 0.0
  %1758 = vmatpush1.msra.mxu0 0.0
  %1759 = vmatprep.subr.mxu0 0.0
  %1760 = vmatpush1.msra.mxu0 0.0
  %1761 = vmatprep.subr.mxu0 0.0
  %1762 = vmatpush1.msra.mxu0 0.0
  %1763 = vmatprep.subr.mxu0 0.0
  %1764 = vmatpush1.msra.mxu0 0.0
  %1765 = vmatprep.subr.mxu0 0.0
  %1766 = vmatpush1.msra.mxu0 0.0
  %1767 = vmatprep.subr.mxu0 0.0
  %1768 = vmatpush1.msra.mxu0 0.0
  %1769 = vmatprep.subr.mxu0 0.0
  %1770 = vmatpush1.msra.mxu0 0.0
  %1771 = vmatprep.subr.mxu0 0.0
  %1772 = vmatpush1.msra.mxu0 0.0
  %1773 = vmatprep.subr.mxu0 0.0
  %1774 = vmatpush1.msra.mxu0 0.0
  %1775 = vmatprep.subr.mxu0 0.0
  %1776 = vmatpush1.msra.mxu0 0.0
  %1777 = vmatprep.subr.mxu0 0.0
  %1778 = vmatpush1.msra.mxu0 0.0
  %1779 = vmatprep.subr.mxu0 0.0
  %1780 = vmatpush1.msra.mxu0 0.0
  %1781 = vmatprep.mubr.f32.mxu0 0.0
  %1782 = vmatmul.mubr.f32.gmra.mrb[0].mxu0 %v1715
  %v1783 = vpop.f32.mrb[0].mxu0
  %v1784 = vadd.f32 %v159, %v1783
  %v1785 = vpop.f32.mrb[0].mxu0
  %1786 = vdwg.mxu0
  %1787 = vmatprep.subr.mxu0 0.0
  %1788 = vmatpush1.msra.mxu0 %v131
  %1789 = vmatprep.subr.mxu0 0.0
  %1790 = vmatpush1.msra.mxu0 %v132
  %1791 = vmatprep.subr.mxu0 0.0
  %1792 = vmatpush1.msra.mxu0 %v133
  %1793 = vmatprep.subr.mxu0 0.0
  %1794 = vmatpush1.msra.mxu0 %v134
  %1795 = vmatprep.subr.mxu0 0.0
  %1796 = vmatpush1.msra.mxu0 %v135
  %1797 = vmatprep.subr.mxu0 0.0
  %1798 = vmatpush1.msra.mxu0 %v136
  %1799 = vmatprep.subr.mxu0 0.0
  %1800 = vmatpush1.msra.mxu0 %v137
  %1801 = vmatprep.subr.mxu0 0.0
  %1802 = vmatpush1.msra.mxu0 %v138
  %1803 = vmatprep.subr.mxu0 0.0
  %1804 = vmatpush1.msra.mxu0 0.0
  %1805 = vmatprep.subr.mxu0 0.0
  %1806 = vmatpush1.msra.mxu0 0.0
  %1807 = vmatprep.subr.mxu0 0.0
  %1808 = vmatpush1.msra.mxu0 0.0
  %1809 = vmatprep.subr.mxu0 0.0
  %1810 = vmatpush1.msra.mxu0 0.0
  %1811 = vmatprep.subr.mxu0 0.0
  %1812 = vmatpush1.msra.mxu0 0.0
  %1813 = vmatprep.subr.mxu0 0.0
  %1814 = vmatpush1.msra.mxu0 0.0
  %1815 = vmatprep.subr.mxu0 0.0
  %1816 = vmatpush1.msra.mxu0 0.0
  %1817 = vmatprep.subr.mxu0 0.0
  %1818 = vmatpush1.msra.mxu0 0.0
  %1819 = vmatprep.subr.mxu0 0.0
  %1820 = vmatpush1.msra.mxu0 0.0
  %1821 = vmatprep.subr.mxu0 0.0
  %1822 = vmatpush1.msra.mxu0 0.0
  %1823 = vmatprep.subr.mxu0 0.0
  %1824 = vmatpush1.msra.mxu0 0.0
  %1825 = vmatprep.subr.mxu0 0.0
  %1826 = vmatpush1.msra.mxu0 0.0
  %1827 = vmatprep.subr.mxu0 0.0
  %1828 = vmatpush1.msra.mxu0 0.0
  %1829 = vmatprep.subr.mxu0 0.0
  %1830 = vmatpush1.msra.mxu0 0.0
  %1831 = vmatprep.subr.mxu0 0.0
  %1832 = vmatpush1.msra.mxu0 0.0
  %1833 = vmatprep.subr.mxu0 0.0
  %1834 = vmatpush1.msra.mxu0 0.0
  %1835 = vmatprep.subr.mxu0 0.0
  %1836 = vmatpush1.msra.mxu0 0.0
  %1837 = vmatprep.subr.mxu0 0.0
  %1838 = vmatpush1.msra.mxu0 0.0
  %1839 = vmatprep.subr.mxu0 0.0
  %1840 = vmatpush1.msra.mxu0 0.0
  %1841 = vmatprep.subr.mxu0 0.0
  %1842 = vmatpush1.msra.mxu0 0.0
  %1843 = vmatprep.subr.mxu0 0.0
  %1844 = vmatpush1.msra.mxu0 0.0
  %1845 = vmatprep.subr.mxu0 0.0
  %1846 = vmatpush1.msra.mxu0 0.0
  %1847 = vmatprep.subr.mxu0 0.0
  %1848 = vmatpush1.msra.mxu0 0.0
  %1849 = vmatprep.subr.mxu0 0.0
  %1850 = vmatpush1.msra.mxu0 0.0
  %1851 = vmatprep.mubr.f32.mxu0 0.0
  %1852 = vmatmul.mubr.f32.gmra.mrb[0].mxu0 %v1641
  %v1853 = vpop.f32.mrb[0].mxu0
  %v1854 = vadd.f32 0.0, %v1853
  %v1855 = vpop.f32.mrb[0].mxu0
  %1856 = vdwg.mxu0
  %v1858 = vrot.slane %v1854, 2
  %v1860 = vadd.f32 %v128, %v1858
  %v1861 = vtanh.pop %v1860
  %v1863 = vrot.slane %v1861, 6
  %v1864 = vsel %vm160, %v1863, 0
  %1866 = vmatprep.subr.mxu0 0.0
  %1867 = vmatpush1.msra.mxu0 %v139
  %1868 = vmatprep.subr.mxu0 0.0
  %1869 = vmatpush1.msra.mxu0 %v140
  %1870 = vmatprep.subr.mxu0 0.0
  %1871 = vmatpush1.msra.mxu0 %v141
  %1872 = vmatprep.subr.mxu0 0.0
  %1873 = vmatpush1.msra.mxu0 %v142
  %1874 = vmatprep.subr.mxu0 0.0
  %1875 = vmatpush1.msra.mxu0 %v143
  %1876 = vmatprep.subr.mxu0 0.0
  %1877 = vmatpush1.msra.mxu0 %v144
  %1878 = vmatprep.subr.mxu0 0.0
  %1879 = vmatpush1.msra.mxu0 %v145
  %1880 = vmatprep.subr.mxu0 0.0
  %1881 = vmatpush1.msra.mxu0 %v146
  %1882 = vmatprep.subr.mxu0 0.0
  %1883 = vmatpush1.msra.mxu0 0.0
  %1884 = vmatprep.subr.mxu0 0.0
  %1885 = vmatpush1.msra.mxu0 0.0
  %1886 = vmatprep.subr.mxu0 0.0
  %1887 = vmatpush1.msra.mxu0 0.0
  %1888 = vmatprep.subr.mxu0 0.0
  %1889 = vmatpush1.msra.mxu0 0.0
  %1890 = vmatprep.subr.mxu0 0.0
  %1891 = vmatpush1.msra.mxu0 0.0
  %1892 = vmatprep.subr.mxu0 0.0
  %1893 = vmatpush1.msra.mxu0 0.0
  %1894 = vmatprep.subr.mxu0 0.0
  %1895 = vmatpush1.msra.mxu0 0.0
  %1896 = vmatprep.subr.mxu0 0.0
  %1897 = vmatpush1.msra.mxu0 0.0
  %1898 = vmatprep.subr.mxu0 0.0
  %1899 = vmatpush1.msra.mxu0 0.0
  %1900 = vmatprep.subr.mxu0 0.0
  %1901 = vmatpush1.msra.mxu0 0.0
  %1902 = vmatprep.subr.mxu0 0.0
  %1903 = vmatpush1.msra.mxu0 0.0
  %1904 = vmatprep.subr.mxu0 0.0
  %1905 = vmatpush1.msra.mxu0 0.0
  %1906 = vmatprep.subr.mxu0 0.0
  %1907 = vmatpush1.msra.mxu0 0.0
  %1908 = vmatprep.subr.mxu0 0.0
  %1909 = vmatpush1.msra.mxu0 0.0
  %1910 = vmatprep.subr.mxu0 0.0
  %1911 = vmatpush1.msra.mxu0 0.0
  %1912 = vmatprep.subr.mxu0 0.0
  %1913 = vmatpush1.msra.mxu0 0.0
  %1914 = vmatprep.subr.mxu0 0.0
  %1915 = vmatpush1.msra.mxu0 0.0
  %1916 = vmatprep.subr.mxu0 0.0
  %1917 = vmatpush1.msra.mxu0 0.0
  %1918 = vmatprep.subr.mxu0 0.0
  %1919 = vmatpush1.msra.mxu0 0.0
  %1920 = vmatprep.subr.mxu0 0.0
  %1921 = vmatpush1.msra.mxu0 0.0
  %1922 = vmatprep.subr.mxu0 0.0
  %1923 = vmatpush1.msra.mxu0 0.0
  %1924 = vmatprep.subr.mxu0 0.0
  %1925 = vmatpush1.msra.mxu0 0.0
  %1926 = vmatprep.subr.mxu0 0.0
  %1927 = vmatpush1.msra.mxu0 0.0
  %1928 = vmatprep.subr.mxu0 0.0
  %1929 = vmatpush1.msra.mxu0 0.0
  %1930 = vmatprep.mubr.f32.mxu0 0.0
  %1931 = vmatmul.mubr.f32.gmra.mrb[0].mxu0 %v1864
  %v1932 = vpop.f32.mrb[0].mxu0
  %v1933 = vadd.f32 %v1784, %v1932
  %v1934 = vpop.f32.mrb[0].mxu0
  %1935 = vdwg.mxu0
  %v1936 = vtanh.pop %v1933
  %v1937 = vrot.slane %v602, 6
  %v1939 = vrot.slane %v825, 4
  %v1941 = vrot.slane %v1048, 2
  %v1943 = vrot.slane %v1490, 6
  %v1945 = vrot.slane %v1713, 4
  %v1948 = vrot.slane %v1936, 2
  %vm1950 = vcmask 1041408
  %v1951 = vsel %vm1950, %v379, %v1937
  %vm1952 = vcmask 1043456
  %v1953 = vsel %vm1952, %v1951, %v1939
  %vm1954 = vcmask 1045504
  %v1955 = vsel %vm1954, %v1953, %v1941
  %v1956 = vsel %vm1950, %v1267, %v1943
  %v1957 = vsel %vm1952, %v1956, %v1945
  %v1958 = vsel %vm1954, %v1957, %v1948
  %v1959 = vld [vmem:[%s2] sm:$0xff]
  %v1960 = vld [vmem:[%s2 + $0x8] sm:$0xff]
  %v1961 = vld [vmem:[%s2 + $0x10] sm:$0xff]
  %v1962 = vld [vmem:[%s2 + $0x18] sm:$0xff]
  %v1963 = vld [vmem:[%s2 + $0x20] sm:$0xff]
  %v1964 = vld [vmem:[%s2 + $0x28] sm:$0xff]
  %v1965 = vld [vmem:[%s2 + $0x30] sm:$0xff]
  %v1966 = vld [vmem:[%s2 + $0x38] sm:$0xff]
  %v1967 = vld [vmem:[%s2 + $0x40] sm:$0x1]
  %v1968 = vlaneseq
  %v1969 = vshrl.u32 %v1968, 7
  %v1970 = vsub.s32 0, %v1969
  %v1971 = vrot.slane %v1967, %v1970
  %v1973 = vsel %vm160, %v1955, 0
  %v1976 = vsel %vm160, %v1958, 0
  %1978 = vmatprep.subr.mxu0 0.0
  %1979 = vmatpush1.msra.mxu0 %v1959
  %1980 = vmatprep.subr.mxu0 0.0
  %1981 = vmatpush1.msra.mxu0 %v1960
  %1982 = vmatprep.subr.mxu0 0.0
  %1983 = vmatpush1.msra.mxu0 %v1961
  %1984 = vmatprep.subr.mxu0 0.0
  %1985 = vmatpush1.msra.mxu0 %v1962
  %1986 = vmatprep.subr.mxu0 0.0
  %1987 = vmatpush1.msra.mxu0 %v1963
  %1988 = vmatprep.subr.mxu0 0.0
  %1989 = vmatpush1.msra.mxu0 %v1964
  %1990 = vmatprep.subr.mxu0 0.0
  %1991 = vmatpush1.msra.mxu0 %v1965
  %1992 = vmatprep.subr.mxu0 0.0
  %1993 = vmatpush1.msra.mxu0 %v1966
  %1994 = vmatprep.subr.mxu0 0.0
  %1995 = vmatpush1.msra.mxu0 0.0
  %1996 = vmatprep.subr.mxu0 0.0
  %1997 = vmatpush1.msra.mxu0 0.0
  %1998 = vmatprep.subr.mxu0 0.0
  %1999 = vmatpush1.msra.mxu0 0.0
  %2000 = vmatprep.subr.mxu0 0.0
  %2001 = vmatpush1.msra.mxu0 0.0
  %2002 = vmatprep.subr.mxu0 0.0
  %2003 = vmatpush1.msra.mxu0 0.0
  %2004 = vmatprep.subr.mxu0 0.0
  %2005 = vmatpush1.msra.mxu0 0.0
  %2006 = vmatprep.subr.mxu0 0.0
  %2007 = vmatpush1.msra.mxu0 0.0
  %2008 = vmatprep.subr.mxu0 0.0
  %2009 = vmatpush1.msra.mxu0 0.0
  %2010 = vmatprep.subr.mxu0 0.0
  %2011 = vmatpush1.msra.mxu0 0.0
  %2012 = vmatprep.subr.mxu0 0.0
  %2013 = vmatpush1.msra.mxu0 0.0
  %2014 = vmatprep.subr.mxu0 0.0
  %2015 = vmatpush1.msra.mxu0 0.0
  %2016 = vmatprep.subr.mxu0 0.0
  %2017 = vmatpush1.msra.mxu0 0.0
  %2018 = vmatprep.subr.mxu0 0.0
  %2019 = vmatpush1.msra.mxu0 0.0
  %2020 = vmatprep.subr.mxu0 0.0
  %2021 = vmatpush1.msra.mxu0 0.0
  %2022 = vmatprep.subr.mxu0 0.0
  %2023 = vmatpush1.msra.mxu0 0.0
  %2024 = vmatprep.subr.mxu0 0.0
  %2025 = vmatpush1.msra.mxu0 0.0
  %2026 = vmatprep.subr.mxu0 0.0
  %2027 = vmatpush1.msra.mxu0 0.0
  %2028 = vmatprep.subr.mxu0 0.0
  %2029 = vmatpush1.msra.mxu0 0.0
  %2030 = vmatprep.subr.mxu0 0.0
  %2031 = vmatpush1.msra.mxu0 0.0
  %2032 = vmatprep.subr.mxu0 0.0
  %2033 = vmatpush1.msra.mxu0 0.0
  %2034 = vmatprep.subr.mxu0 0.0
  %2035 = vmatpush1.msra.mxu0 0.0
  %2036 = vmatprep.subr.mxu0 0.0
  %2037 = vmatpush1.msra.mxu0 0.0
  %2038 = vmatprep.subr.mxu0 0.0
  %2039 = vmatpush1.msra.mxu0 0.0
  %2040 = vmatprep.subr.mxu0 0.0
  %2041 = vmatpush1.msra.mxu0 0.0
  %2042 = vmatprep.mubr.f32.mxu0 0.0
  %2043 = vmatmul.mubr.f32.gmra.mrb[0].mxu0 %v1973
  %v2044 = vpop.f32.mrb[0].mxu0
  %v2045 = vadd.f32 %v1971, %v2044
  %v2046 = vpop.f32.mrb[0].mxu0
  %2047 = vmatprep.mubr.f32.mxu0 0.0
  %2048 = vmatmul.mubr.f32.gmra.mrb[0].mxu0 %v1976
  %v2049 = vpop.f32.mrb[0].mxu0
  %v2050 = vadd.f32 %v1971, %v2049
  %v2051 = vpop.f32.mrb[0].mxu0
  %2052 = vdwg.mxu0
  %vm2053 = vcmask 80896
  %2054 = vst.msk [vmem:[%s3] sm:$0xff] %vm2053, %v2045
  %2055 = vst.msk [vmem:[%s3 + $0x8] sm:$0xff] %vm2053, %v2050
  // Predicated region
  $region14: #{my_adv_rnn_forward.1} parent=0 // pred_check
    _
  $region15: #{my_adv_rnn_forward.1} parent=0 // pred_check_branch
    %2057 = sbr.rel (0) target = $region17
  $region16: #{my_adv_rnn_forward.1} parent=0 // pred_region
    _
  $region17: #{my_adv_rnn_forward.1} parent=0 // pred_fallthru
    _
  // Predicated region
  $region18: #{my_adv_rnn_forward.1} parent=0 // pred_check
    _
  $region19: #{my_adv_rnn_forward.1} parent=0 // pred_check_branch
    %2059 = sbr.rel (0) target = $region21
  $region20: #{my_adv_rnn_forward.1} parent=0 // pred_region
    _
  $region21: #{my_adv_rnn_forward.1} parent=0 // pred_fallthru
    _

</llo_original>
